<compile_context>
chip_gen: v7x
topology: tpu7x:2x2x1
jax: 0.10.0
libtpu: 0.0.40
codegen_flags: <defaults>
</compile_context>

<pallas_src>
import jax
import jax.numpy as jnp
from jax.experimental import pallas as pl
from jax.experimental.pallas import tpu as pltpu

PACK_LANES = 128  # one full vreg lane row


def nlayernet_packed_kernel(xp_ref, wpack_ref, bpack_ref, op_ref):
    """One batch tile in the lane-dense packed layout.

    xp_ref    : (TM, 128)       64 batch rows per packed row (d_in lanes each)
    wpack_ref : (128, 64*d_out) block-diagonal kron(I_64, W_eff), VMEM-resident
    bpack_ref : (1, 64*d_out)   bias tiled 64x
    op_ref    : (TM, 64*d_out)  64 batch rows per packed row (d_out lanes each)
    """
    s = jax.nn.sigmoid(xp_ref[...])                      # EUP/VPU on dense lanes
    y = jnp.dot(s, wpack_ref[...],
                preferred_element_type=jnp.float32,
                precision=jax.lax.Precision.HIGHEST)     # exact f32 MXU contraction
    op_ref[...] = y + bpack_ref[...]                     # bias after contraction


def prepare_params(w2, b2, d_in, *, pack_lanes=PACK_LANES):
    """One-time weight fold + lane packing (weight-load time, NOT per call).

    w2 : (d_out, d_in*lay)  PyTorch-layout linear2 weight
    b2 : (d_out,)           linear2 bias
    Returns (w_pack (128, 64*d_out), b_pack (1, 64*d_out)).
    """
    w2 = jnp.asarray(w2, jnp.float32)
    b2 = jnp.asarray(b2, jnp.float32)
    d_out, kl = w2.shape
    assert kl % d_in == 0, "linear2 in_features must be D_in*lay (requires D_in == H)"
    assert pack_lanes % d_in == 0
    lay = kl // d_in
    # conc = [s]*lay  =>  summing the `lay` replicated column blocks of w2 is exact.
    w_eff = w2.reshape(d_out, lay, d_in).sum(axis=1).T            # (d_in, d_out)
    b_in = pack_lanes // d_in                                      # batch rows / packed row
    w_pack = jnp.kron(jnp.eye(b_in, dtype=jnp.float32), w_eff)     # (128, b_in*d_out)
    b_pack = jnp.tile(b2.reshape(1, d_out), (1, b_in))             # (1, b_in*d_out)
    return w_pack, b_pack


def _pick_tile_rows(r, tile_rows_max):
    """Packed (128-lane) rows per grid step."""
    if r <= 16:
        return r                                # tiny batch: one full-extent step
    tm = min(tile_rows_max, (r + 1) // 2)       # keep >= 2 grid steps (v7x dual-TC)
    return max(8, (tm // 8) * 8)                # (8, 128) block-shape constraint


def nlayernet_forward(x, w_pack, b_pack, *, tile_rows_max=2048):
    """x: (N, d_in) f32; w_pack: (128, 64*d_out) f32; b_pack: (1, 64*d_out) f32."""
    n, d_in = x.shape
    pack_lanes, out_width = w_pack.shape
    b_in = pack_lanes // d_in                   # batch rows per packed row (64)
    d_out = out_width // b_in

    # Pad batch to a multiple of b_in so the lane-dense reshape is exact.
    n_pad = ((n + b_in - 1) // b_in) * b_in
    if n_pad != n:
        x = jnp.pad(x, ((0, n_pad - n), (0, 0)))
    r = n_pad // b_in
    xp = x.reshape(r, pack_lanes)               # free reshape (contiguous row-major)

    tm = _pick_tile_rows(r, tile_rows_max)
    grid = (pl.cdiv(r, tm),)

    yp = pl.pallas_call(
        nlayernet_packed_kernel,
        out_shape=jax.ShapeDtypeStruct((r, out_width), jnp.float32),
        grid=grid,
        in_specs=[
            pl.BlockSpec((tm, pack_lanes), lambda i: (i, 0)),         # batch-tiled input
            pl.BlockSpec((pack_lanes, out_width), lambda i: (0, 0)),  # VMEM-resident weight
            pl.BlockSpec((1, out_width), lambda i: (0, 0)),           # VMEM-resident bias
        ],
        out_specs=pl.BlockSpec((tm, out_width), lambda i: (i, 0)),
        compiler_params=pltpu.CompilerParams(
            dimension_semantics=("parallel",),      # shards grid across v7x's 2 TCs
            vmem_limit_bytes=32 * 1024 * 1024,      # explicit cap, safe on v5e/v6e/v7x
        ),
        cost_estimate=pl.CostEstimate(
            flops=2 * n_pad * d_in * d_out,
            transcendentals=n_pad * d_in,
            bytes_accessed=n_pad * (d_in + d_out) * 4,
        ),
    )(xp, w_pack, b_pack)

    y = yp.reshape(n_pad, d_out)                # free reshape back to (N, d_out)
    return y if n_pad == n else y[:n]


def reference_forward(x, w2, b2, lay):
    """Pure-JAX reference mirroring the PyTorch forward line by line."""
    xs = [jax.nn.sigmoid(x) for _ in range(lay)]
    conc = jnp.concatenate(xs, axis=1)
    return conc @ w2.T + b2


if __name__ == "__main__":
    # Small, shape-consistent configuration: D_in must equal H (= 2).
    N, D_IN, H, LAY, D_OUT = 256, 2, 2, 16, 8
    assert D_IN == H, "original forward is only valid when D_in == H"

    key = jax.random.PRNGKey(0)
    kx, kw, kb = jax.random.split(key, 3)

    x = jax.random.normal(kx, (N, D_IN), dtype=jnp.float32)

    # Deterministic init of linear2 (the self.linears params are dead weights —
    # never used in the forward — so we don't materialize them).
    bound = float(1.0 / (H * LAY) ** 0.5)
    w2 = jax.random.uniform(kw, (D_OUT, H * LAY), jnp.float32, -bound, bound)
    b2 = jax.random.uniform(kb, (D_OUT,), jnp.float32, -bound, bound)

    # One-time weight fold + lane packing (outside the per-call path).
    w_pack, b_pack = prepare_params(w2, b2, D_IN)

    y = jax.block_until_ready(nlayernet_forward(x, w_pack, b_pack))
    y_ref = reference_forward(x, w2, b2, LAY)
    assert y.shape == (N, D_OUT)
    assert jnp.allclose(y, y_ref, atol=1e-4, rtol=1e-4), "mismatch vs reference"

    # Ragged batch: exercises the pad-to-multiple-of-64 path.
    x2 = jax.random.normal(jax.random.PRNGKey(1), (100, D_IN), dtype=jnp.float32)
    y2 = jax.block_until_ready(nlayernet_forward(x2, w_pack, b_pack))
    assert jnp.allclose(y2, reference_forward(x2, w2, b2, LAY), atol=1e-4, rtol=1e-4)

    print("KERNEL_OK")
</pallas_src>

<mosaic_0001>
module attributes {stable_mosaic.version = 11 : i64} {
  func.func @nlayernet_packed_kernel(%arg0: i32, %arg1: memref<4x128xf32, #tpu.memory_space<vmem>>, %arg2: memref<128x512xf32, #tpu.memory_space<vmem>>, %arg3: memref<1x512xf32, #tpu.memory_space<vmem>>, %arg4: memref<4x512xf32, #tpu.memory_space<vmem>>) attributes {dimension_semantics = [#tpu.dimension_semantics<parallel>], iteration_bounds = array<i64: 1>, scalar_prefetch = 0 : i64, scratch_operands = 0 : i64, tpu.core_type = #tpu.core_type<tc>, window_params = [{transform_indices = @transform_0, window_bounds = array<i64: 4, 128>}, {pipeline_mode = #tpu.pipeline_mode<synchronous>, transform_indices = @transform_1, window_bounds = array<i64: 128, 512>}, {pipeline_mode = #tpu.pipeline_mode<synchronous>, transform_indices = @transform_2, window_bounds = array<i64: 1, 512>}, {transform_indices = @transform_3, window_bounds = array<i64: 4, 512>}]} {
    %c0 = arith.constant 0 : index
    %c0_0 = arith.constant 0 : index
    %0 = vector.load %arg1[%c0, %c0_0] : memref<4x128xf32, #tpu.memory_space<vmem>>, vector<4x128xf32>
    %1 = arith.negf %0 : vector<4x128xf32>
    %2 = math.exp %1 : vector<4x128xf32>
    %cst = arith.constant 1.000000e+00 : f32
    %3 = vector.broadcast %cst : f32 to vector<4x128xf32>
    %4 = arith.addf %3, %2 : vector<4x128xf32>
    %5 = arith.divf %3, %4 : vector<4x128xf32>
    %c0_1 = arith.constant 0 : index
    %c0_2 = arith.constant 0 : index
    %6 = vector.load %arg2[%c0_1, %c0_2] : memref<128x512xf32, #tpu.memory_space<vmem>>, vector<128x512xf32>
    %cst_3 = arith.constant dense<0.000000e+00> : vector<4x512xf32>
    %7 = tpu.matmul %5, %6, %cst_3 {dimension_numbers = #tpu.dot_dimension_numbers<[1], [0], [0], [1], [0, 0, 1, 1], [], []>, precision = #tpu.contract_precision<fp32>} : vector<4x128xf32>, vector<128x512xf32>, vector<4x512xf32> -> vector<4x512xf32>
    %c0_4 = arith.constant 0 : index
    %c0_5 = arith.constant 0 : index
    %8 = vector.load %arg3[%c0_4, %c0_5] : memref<1x512xf32, #tpu.memory_space<vmem>>, vector<1x512xf32>
    %9 = vector.broadcast %8 : vector<1x512xf32> to vector<4x512xf32>
    %10 = arith.addf %7, %9 : vector<4x512xf32>
    %c0_6 = arith.constant 0 : index
    %c0_7 = arith.constant 0 : index
    %11 = vector.load %arg4[%c0_6, %c0_7] : memref<4x512xf32, #tpu.memory_space<vmem>>, vector<4x512xf32>
    tpu.vector_store %arg4[%c0_6, %c0_7], %10 {strides = array<i32>} : memref<4x512xf32, #tpu.memory_space<vmem>>, vector<4x512xf32>,
    return
  }
  func.func @transform_0(%arg0: i32) -> (i32, i32) {
    %c0_i32 = arith.constant 0 : i32
    %c0_i32_0 = arith.constant 0 : i32
    return %arg0, %c0_i32 : i32, i32
  }
  func.func @transform_1(%arg0: i32) -> (i32, i32) {
    %c0_i32 = arith.constant 0 : i32
    %c0_i32_0 = arith.constant 0 : i32
    %c0_i32_1 = arith.constant 0 : i32
    return %c0_i32, %c0_i32_0 : i32, i32
  }
  func.func @transform_2(%arg0: i32) -> (i32, i32) {
    %c0_i32 = arith.constant 0 : i32
    %c0_i32_0 = arith.constant 0 : i32
    %c0_i32_1 = arith.constant 0 : i32
    return %c0_i32, %c0_i32_0 : i32, i32
  }
  func.func @transform_3(%arg0: i32) -> (i32, i32) {
    %c0_i32 = arith.constant 0 : i32
    %c0_i32_0 = arith.constant 0 : i32
    return %arg0, %c0_i32 : i32, i32
  }
}

</mosaic_0001>

<llo_original>
// kernel: tpu_custom_call.1
$region0: #{tpu_custom_call.1}
  #allocation0 [shape = 'u32[]', space=smem, size = 0x4, offset = 0x4, fixed_abs, tag = 'smem constant byte address 0x4 - core index']
  #allocation1 [shape = 'u32[144,128]{1,0:T(1,128)}', space=vmem, size = 0x12000, scoped, tag = 'internal scratch']
  %s0 = inlined_call_operand.hbm [shape: f32[4,128], index: 0, kind: input, shape index: {}]
  %s1 = inlined_call_operand.hbm [shape: f32[128,512], index: 1, kind: input, shape index: {}]
  %s2 = inlined_call_operand.vmem [shape: f32[1,512], index: 2, kind: input, shape index: {}]
  %s3 = inlined_call_operand.hbm [shape: f32[4,512], index: 3, kind: output, shape index: {}]
  %s4 = sld [smem:[#allocation0]]
  $region30: #{tpu_custom_call.1} parent=0
    _
  %s6 = ssub.s32 1, %s4
  %s7 = scalar_select 0, %s6, %s4
  $region1: #{tpu_custom_call.1} parent=0
    #allocation2 [shape = 'u8[2048]{0}', space=vmem, size = 0x800, scoped, tag = 'input window, operand 0, single buffered']
    #allocation3 [shape = 's32[1]{0}', space=sflag, size = 0x4, scoped, tag = 'scoped memory for tpu_custom_call.1']
    #allocation4 [shape = 's32[1]{0}', space=sflag, size = 0x4, scoped, tag = 'scoped memory for tpu_custom_call.1']
    #allocation5 [shape = 'u8[262144]{0}', space=vmem, size = 0x40000, scoped, tag = 'input window, operand 1, single buffered']
    #allocation6 [shape = 's32[1]{0}', space=sflag, size = 0x4, scoped, tag = 'scoped memory for tpu_custom_call.1']
    #allocation7 [shape = 'u8[8192]{0}', space=vmem, size = 0x2000, scoped, tag = 'output window, operand 0, single buffered']
    %8 = vsyncpa [#allocation3], 0
    %9 = vsyncpa [#allocation6], 0
    %10 = vsyncpa [#allocation4], 0
    // Predicated region
    $region2: #{tpu_custom_call.1} parent=1 // pred_check
      _
    $region3: #{tpu_custom_call.1} parent=1 // pred_check_branch
      %12 = sbr.rel (0) target = $region5
    $region4: #{tpu_custom_call.1} parent=1 // pred_region
      %s14 = ssub.s32 64, 64
      %15 = vsyncadd [#allocation3], %s14
      %s17 = sshll.u32 [#allocation2], 4
      %s18 = int_to_ptr.vmem [resolvable:$true] %s17
      %20 = dma.hbm_to_vmem [thread:$0]  %s0, 64, %s18, [#allocation3]
    $region5: #{tpu_custom_call.1} parent=1 // pred_fallthru
      _
    // Predicated region
    $region6: #{tpu_custom_call.1} parent=1 // pred_check
      _
    $region7: #{tpu_custom_call.1} parent=1 // pred_check_branch
      %22 = sbr.rel (0) target = $region9
    $region8: #{tpu_custom_call.1} parent=1 // pred_region
      %s24 = ssub.s32 8192, 8192
      %25 = vsyncadd [#allocation6], %s24
      %s26 = sshll.u32 [#allocation5], 4
      %s27 = int_to_ptr.vmem [resolvable:$true] %s26
      %32 = dma.hbm_to_vmem [thread:$0]  %s1, 8192, %s27, [#allocation6], 512, 512, 32
    $region9: #{tpu_custom_call.1} parent=1 // pred_fallthru
      _
    // Predicated region
    $region10: #{tpu_custom_call.1} parent=1 // pred_check
      _
    $region11: #{tpu_custom_call.1} parent=1 // pred_check_branch
      %34 = sbr.rel (0) target = $region13
    $region12: #{tpu_custom_call.1} parent=1 // pred_region
      _
    $region13: #{tpu_custom_call.1} parent=1 // pred_fallthru
      _
    // Predicated region
    $region14: #{tpu_custom_call.1} parent=1 // pred_check
      _
    $region15: #{tpu_custom_call.1} parent=1 // pred_check_branch
      %36 = sbr.rel (0) target = $region17
    $region16: #{tpu_custom_call.1} parent=1 // pred_region
      %37 = dma.done [#allocation3], 64
    $region17: #{tpu_custom_call.1} parent=1 // pred_fallthru
      _
    // Predicated region
    $region18: #{tpu_custom_call.1} parent=1 // pred_check
      _
    $region19: #{tpu_custom_call.1} parent=1 // pred_check_branch
      %39 = sbr.rel (0) target = $region21
    $region20: #{tpu_custom_call.1} parent=1 // pred_region
      %40 = dma.done [#allocation6], 8192
    $region21: #{tpu_custom_call.1} parent=1 // pred_fallthru
      _
    %v41 = vld [vmem:[#allocation2] sm:$0xf]
    %v42 = vxor.u32 %v41, 2147483648
    %v43 = vmul.f32 %v42, 1.442695
    %v44 = vpow.pop %v43
    %v45 = vadd.f32 %v44, 1.0
    %v46 = vrcp.pop %v45
    %v47 = vmul.f32 1.0, %v46
    %v48 = vld [vmem:[#allocation5] sm:$0xff]
    %v49 = vld [vmem:[#allocation5 + $0x8] sm:$0xff]
    %v50 = vld [vmem:[#allocation5 + $0x10] sm:$0xff]
    %v51 = vld [vmem:[#allocation5 + $0x18] sm:$0xff]
    %v52 = vld [vmem:[#allocation5 + $0x20] sm:$0xff]
    %v53 = vld [vmem:[#allocation5 + $0x28] sm:$0xff]
    %v54 = vld [vmem:[#allocation5 + $0x30] sm:$0xff]
    %v55 = vld [vmem:[#allocation5 + $0x38] sm:$0xff]
    %v56 = vld [vmem:[#allocation5 + $0x40] sm:$0xff]
    %v57 = vld [vmem:[#allocation5 + $0x48] sm:$0xff]
    %v58 = vld [vmem:[#allocation5 + $0x50] sm:$0xff]
    %v59 = vld [vmem:[#allocation5 + $0x58] sm:$0xff]
    %v60 = vld [vmem:[#allocation5 + $0x60] sm:$0xff]
    %v61 = vld [vmem:[#allocation5 + $0x68] sm:$0xff]
    %v62 = vld [vmem:[#allocation5 + $0x70] sm:$0xff]
    %v63 = vld [vmem:[#allocation5 + $0x78] sm:$0xff]
    %v64 = vld [vmem:[#allocation5 + $0x80] sm:$0xff]
    %v65 = vld [vmem:[#allocation5 + $0x88] sm:$0xff]
    %v66 = vld [vmem:[#allocation5 + $0x90] sm:$0xff]
    %v67 = vld [vmem:[#allocation5 + $0x98] sm:$0xff]
    %v68 = vld [vmem:[#allocation5 + $0xa0] sm:$0xff]
    %v69 = vld [vmem:[#allocation5 + $0xa8] sm:$0xff]
    %v70 = vld [vmem:[#allocation5 + $0xb0] sm:$0xff]
    %v71 = vld [vmem:[#allocation5 + $0xb8] sm:$0xff]
    %v72 = vld [vmem:[#allocation5 + $0xc0] sm:$0xff]
    %v73 = vld [vmem:[#allocation5 + $0xc8] sm:$0xff]
    %v74 = vld [vmem:[#allocation5 + $0xd0] sm:$0xff]
    %v75 = vld [vmem:[#allocation5 + $0xd8] sm:$0xff]
    %v76 = vld [vmem:[#allocation5 + $0xe0] sm:$0xff]
    %v77 = vld [vmem:[#allocation5 + $0xe8] sm:$0xff]
    %v78 = vld [vmem:[#allocation5 + $0xf0] sm:$0xff]
    %v79 = vld [vmem:[#allocation5 + $0xf8] sm:$0xff]
    %v80 = vld [vmem:[#allocation5 + $0x100] sm:$0xff]
    %v81 = vld [vmem:[#allocation5 + $0x108] sm:$0xff]
    %v82 = vld [vmem:[#allocation5 + $0x110] sm:$0xff]
    %v83 = vld [vmem:[#allocation5 + $0x118] sm:$0xff]
    %v84 = vld [vmem:[#allocation5 + $0x120] sm:$0xff]
    %v85 = vld [vmem:[#allocation5 + $0x128] sm:$0xff]
    %v86 = vld [vmem:[#allocation5 + $0x130] sm:$0xff]
    %v87 = vld [vmem:[#allocation5 + $0x138] sm:$0xff]
    %v88 = vld [vmem:[#allocation5 + $0x140] sm:$0xff]
    %v89 = vld [vmem:[#allocation5 + $0x148] sm:$0xff]
    %v90 = vld [vmem:[#allocation5 + $0x150] sm:$0xff]
    %v91 = vld [vmem:[#allocation5 + $0x158] sm:$0xff]
    %v92 = vld [vmem:[#allocation5 + $0x160] sm:$0xff]
    %v93 = vld [vmem:[#allocation5 + $0x168] sm:$0xff]
    %v94 = vld [vmem:[#allocation5 + $0x170] sm:$0xff]
    %v95 = vld [vmem:[#allocation5 + $0x178] sm:$0xff]
    %v96 = vld [vmem:[#allocation5 + $0x180] sm:$0xff]
    %v97 = vld [vmem:[#allocation5 + $0x188] sm:$0xff]
    %v98 = vld [vmem:[#allocation5 + $0x190] sm:$0xff]
    %v99 = vld [vmem:[#allocation5 + $0x198] sm:$0xff]
    %v100 = vld [vmem:[#allocation5 + $0x1a0] sm:$0xff]
    %v101 = vld [vmem:[#allocation5 + $0x1a8] sm:$0xff]
    %v102 = vld [vmem:[#allocation5 + $0x1b0] sm:$0xff]
    %v103 = vld [vmem:[#allocation5 + $0x1b8] sm:$0xff]
    %v104 = vld [vmem:[#allocation5 + $0x1c0] sm:$0xff]
    %v105 = vld [vmem:[#allocation5 + $0x1c8] sm:$0xff]
    %v106 = vld [vmem:[#allocation5 + $0x1d0] sm:$0xff]
    %v107 = vld [vmem:[#allocation5 + $0x1d8] sm:$0xff]
    %v108 = vld [vmem:[#allocation5 + $0x1e0] sm:$0xff]
    %v109 = vld [vmem:[#allocation5 + $0x1e8] sm:$0xff]
    %v110 = vld [vmem:[#allocation5 + $0x1f0] sm:$0xff]
    %v111 = vld [vmem:[#allocation5 + $0x1f8] sm:$0xff]
    %v112 = vld [vmem:[%s2] sm:$0xf]
    %v114 = vlaneseq
    %v115 = vshrl.u32 %v114, 7
    %v116 = vsub.s32 0, %v115
    %v117 = vrot.slane %v112, %v116
    %v118 = vlaneseq
    %v119 = vshrl.u32 %v118, 7
    %v120 = vsub.s32 1, %v119
    %v121 = vrot.slane %v112, %v120
    %v122 = vlaneseq
    %v123 = vshrl.u32 %v122, 7
    %v124 = vsub.s32 2, %v123
    %v125 = vrot.slane %v112, %v124
    %v126 = vlaneseq
    %v127 = vshrl.u32 %v126, 7
    %v128 = vsub.s32 3, %v127
    %v129 = vrot.slane %v112, %v128
    %v134 = vand.u32 %v49, 4294901760
    %135 = vmatprep.subr.mxu0 %v134
    %v136 = vand.u32 %v48, 4294901760
    %137 = vmatpush1.msra.mxu0 %v136
    %v138 = vand.u32 %v53, 4294901760
    %139 = vmatprep.subr.mxu0 %v138
    %v140 = vand.u32 %v52, 4294901760
    %141 = vmatpush1.msra.mxu0 %v140
    %v142 = vand.u32 %v57, 4294901760
    %143 = vmatprep.subr.mxu0 %v142
    %v144 = vand.u32 %v56, 4294901760
    %145 = vmatpush1.msra.mxu0 %v144
    %v146 = vand.u32 %v61, 4294901760
    %147 = vmatprep.subr.mxu0 %v146
    %v148 = vand.u32 %v60, 4294901760
    %149 = vmatpush1.msra.mxu0 %v148
    %v150 = vand.u32 %v65, 4294901760
    %151 = vmatprep.subr.mxu0 %v150
    %v152 = vand.u32 %v64, 4294901760
    %153 = vmatpush1.msra.mxu0 %v152
    %v154 = vand.u32 %v69, 4294901760
    %155 = vmatprep.subr.mxu0 %v154
    %v156 = vand.u32 %v68, 4294901760
    %157 = vmatpush1.msra.mxu0 %v156
    %v158 = vand.u32 %v73, 4294901760
    %159 = vmatprep.subr.mxu0 %v158
    %v160 = vand.u32 %v72, 4294901760
    %161 = vmatpush1.msra.mxu0 %v160
    %v162 = vand.u32 %v77, 4294901760
    %163 = vmatprep.subr.mxu0 %v162
    %v164 = vand.u32 %v76, 4294901760
    %165 = vmatpush1.msra.mxu0 %v164
    %v166 = vand.u32 %v81, 4294901760
    %167 = vmatprep.subr.mxu0 %v166
    %v168 = vand.u32 %v80, 4294901760
    %169 = vmatpush1.msra.mxu0 %v168
    %v170 = vand.u32 %v85, 4294901760
    %171 = vmatprep.subr.mxu0 %v170
    %v172 = vand.u32 %v84, 4294901760
    %173 = vmatpush1.msra.mxu0 %v172
    %v174 = vand.u32 %v89, 4294901760
    %175 = vmatprep.subr.mxu0 %v174
    %v176 = vand.u32 %v88, 4294901760
    %177 = vmatpush1.msra.mxu0 %v176
    %v178 = vand.u32 %v93, 4294901760
    %179 = vmatprep.subr.mxu0 %v178
    %v180 = vand.u32 %v92, 4294901760
    %181 = vmatpush1.msra.mxu0 %v180
    %v182 = vand.u32 %v97, 4294901760
    %183 = vmatprep.subr.mxu0 %v182
    %v184 = vand.u32 %v96, 4294901760
    %185 = vmatpush1.msra.mxu0 %v184
    %v186 = vand.u32 %v101, 4294901760
    %187 = vmatprep.subr.mxu0 %v186
    %v188 = vand.u32 %v100, 4294901760
    %189 = vmatpush1.msra.mxu0 %v188
    %v190 = vand.u32 %v105, 4294901760
    %191 = vmatprep.subr.mxu0 %v190
    %v192 = vand.u32 %v104, 4294901760
    %193 = vmatpush1.msra.mxu0 %v192
    %v194 = vand.u32 %v109, 4294901760
    %195 = vmatprep.subr.mxu0 %v194
    %v196 = vand.u32 %v108, 4294901760
    %197 = vmatpush1.msra.mxu0 %v196
    %198 = vmatprep.subr.mxu0 0.0
    %199 = vmatpush1.msra.mxu0 0.0
    %200 = vmatprep.subr.mxu0 0.0
    %201 = vmatpush1.msra.mxu0 0.0
    %202 = vmatprep.subr.mxu0 0.0
    %203 = vmatpush1.msra.mxu0 0.0
    %204 = vmatprep.subr.mxu0 0.0
    %205 = vmatpush1.msra.mxu0 0.0
    %206 = vmatprep.subr.mxu0 0.0
    %207 = vmatpush1.msra.mxu0 0.0
    %208 = vmatprep.subr.mxu0 0.0
    %209 = vmatpush1.msra.mxu0 0.0
    %210 = vmatprep.subr.mxu0 0.0
    %211 = vmatpush1.msra.mxu0 0.0
    %212 = vmatprep.subr.mxu0 0.0
    %213 = vmatpush1.msra.mxu0 0.0
    %214 = vmatprep.subr.mxu0 0.0
    %215 = vmatpush1.msra.mxu0 0.0
    %216 = vmatprep.subr.mxu0 0.0
    %217 = vmatpush1.msra.mxu0 0.0
    %218 = vmatprep.subr.mxu0 0.0
    %219 = vmatpush1.msra.mxu0 0.0
    %220 = vmatprep.subr.mxu0 0.0
    %221 = vmatpush1.msra.mxu0 0.0
    %222 = vmatprep.subr.mxu0 0.0
    %223 = vmatpush1.msra.mxu0 0.0
    %224 = vmatprep.subr.mxu0 0.0
    %225 = vmatpush1.msra.mxu0 0.0
    %226 = vmatprep.subr.mxu0 0.0
    %227 = vmatpush1.msra.mxu0 0.0
    %228 = vmatprep.subr.mxu0 0.0
    %229 = vmatpush1.msra.mxu0 0.0
    %230 = vmatprep.mubr.f32.mxu0 0.0
    %v231 = vand.u32 %v47, 4294901760
    %v232 = vsub.f32 %v47, %v231
    %v233 = vand.u32 %v232, 4294901760
    %v234 = vsub.f32 %v232, %v233
    %v235 = vand.u32 %v234, 4294901760
    %236 = vmatmul.mubr.f32.gmra.mrb[0].mxu0 %v235
    %v237 = vpop.f32.mrb[0].mxu0
    %v238 = vadd.f32 %v117, %v237
    %v239 = vpop.f32.mrb[0].mxu0
    %v240 = vadd.f32 %v121, %v239
    %241 = vdwg.mxu0
    %v242 = vand.u32 %v49, 4294901760
    %v243 = vsub.f32 %v49, %v242
    %v244 = vand.u32 %v243, 4294901760
    %v245 = vsub.f32 %v243, %v244
    %v246 = vand.u32 %v245, 4294901760
    %247 = vmatprep.subr.mxu0 %v246
    %v248 = vand.u32 %v48, 4294901760
    %v249 = vsub.f32 %v48, %v248
    %v250 = vand.u32 %v249, 4294901760
    %v251 = vsub.f32 %v249, %v250
    %v252 = vand.u32 %v251, 4294901760
    %253 = vmatpush1.msra.mxu0 %v252
    %v254 = vand.u32 %v53, 4294901760
    %v255 = vsub.f32 %v53, %v254
    %v256 = vand.u32 %v255, 4294901760
    %v257 = vsub.f32 %v255, %v256
    %v258 = vand.u32 %v257, 4294901760
    %259 = vmatprep.subr.mxu0 %v258
    %v260 = vand.u32 %v52, 4294901760
    %v261 = vsub.f32 %v52, %v260
    %v262 = vand.u32 %v261, 4294901760
    %v263 = vsub.f32 %v261, %v262
    %v264 = vand.u32 %v263, 4294901760
    %265 = vmatpush1.msra.mxu0 %v264
    %v266 = vand.u32 %v57, 4294901760
    %v267 = vsub.f32 %v57, %v266
    %v268 = vand.u32 %v267, 4294901760
    %v269 = vsub.f32 %v267, %v268
    %v270 = vand.u32 %v269, 4294901760
    %271 = vmatprep.subr.mxu0 %v270
    %v272 = vand.u32 %v56, 4294901760
    %v273 = vsub.f32 %v56, %v272
    %v274 = vand.u32 %v273, 4294901760
    %v275 = vsub.f32 %v273, %v274
    %v276 = vand.u32 %v275, 4294901760
    %277 = vmatpush1.msra.mxu0 %v276
    %v278 = vand.u32 %v61, 4294901760
    %v279 = vsub.f32 %v61, %v278
    %v280 = vand.u32 %v279, 4294901760
    %v281 = vsub.f32 %v279, %v280
    %v282 = vand.u32 %v281, 4294901760
    %283 = vmatprep.subr.mxu0 %v282
    %v284 = vand.u32 %v60, 4294901760
    %v285 = vsub.f32 %v60, %v284
    %v286 = vand.u32 %v285, 4294901760
    %v287 = vsub.f32 %v285, %v286
    %v288 = vand.u32 %v287, 4294901760
    %289 = vmatpush1.msra.mxu0 %v288
    %v290 = vand.u32 %v65, 4294901760
    %v291 = vsub.f32 %v65, %v290
    %v292 = vand.u32 %v291, 4294901760
    %v293 = vsub.f32 %v291, %v292
    %v294 = vand.u32 %v293, 4294901760
    %295 = vmatprep.subr.mxu0 %v294
    %v296 = vand.u32 %v64, 4294901760
    %v297 = vsub.f32 %v64, %v296
    %v298 = vand.u32 %v297, 4294901760
    %v299 = vsub.f32 %v297, %v298
    %v300 = vand.u32 %v299, 4294901760
    %301 = vmatpush1.msra.mxu0 %v300
    %v302 = vand.u32 %v69, 4294901760
    %v303 = vsub.f32 %v69, %v302
    %v304 = vand.u32 %v303, 4294901760
    %v305 = vsub.f32 %v303, %v304
    %v306 = vand.u32 %v305, 4294901760
    %307 = vmatprep.subr.mxu0 %v306
    %v308 = vand.u32 %v68, 4294901760
    %v309 = vsub.f32 %v68, %v308
    %v310 = vand.u32 %v309, 4294901760
    %v311 = vsub.f32 %v309, %v310
    %v312 = vand.u32 %v311, 4294901760
    %313 = vmatpush1.msra.mxu0 %v312
    %v314 = vand.u32 %v73, 4294901760
    %v315 = vsub.f32 %v73, %v314
    %v316 = vand.u32 %v315, 4294901760
    %v317 = vsub.f32 %v315, %v316
    %v318 = vand.u32 %v317, 4294901760
    %319 = vmatprep.subr.mxu0 %v318
    %v320 = vand.u32 %v72, 4294901760
    %v321 = vsub.f32 %v72, %v320
    %v322 = vand.u32 %v321, 4294901760
    %v323 = vsub.f32 %v321, %v322
    %v324 = vand.u32 %v323, 4294901760
    %325 = vmatpush1.msra.mxu0 %v324
    %v326 = vand.u32 %v77, 4294901760
    %v327 = vsub.f32 %v77, %v326
    %v328 = vand.u32 %v327, 4294901760
    %v329 = vsub.f32 %v327, %v328
    %v330 = vand.u32 %v329, 4294901760
    %331 = vmatprep.subr.mxu0 %v330
    %v332 = vand.u32 %v76, 4294901760
    %v333 = vsub.f32 %v76, %v332
    %v334 = vand.u32 %v333, 4294901760
    %v335 = vsub.f32 %v333, %v334
    %v336 = vand.u32 %v335, 4294901760
    %337 = vmatpush1.msra.mxu0 %v336
    %v338 = vand.u32 %v81, 4294901760
    %v339 = vsub.f32 %v81, %v338
    %v340 = vand.u32 %v339, 4294901760
    %v341 = vsub.f32 %v339, %v340
    %v342 = vand.u32 %v341, 4294901760
    %343 = vmatprep.subr.mxu0 %v342
    %v344 = vand.u32 %v80, 4294901760
    %v345 = vsub.f32 %v80, %v344
    %v346 = vand.u32 %v345, 4294901760
    %v347 = vsub.f32 %v345, %v346
    %v348 = vand.u32 %v347, 4294901760
    %349 = vmatpush1.msra.mxu0 %v348
    %v350 = vand.u32 %v85, 4294901760
    %v351 = vsub.f32 %v85, %v350
    %v352 = vand.u32 %v351, 4294901760
    %v353 = vsub.f32 %v351, %v352
    %v354 = vand.u32 %v353, 4294901760
    %355 = vmatprep.subr.mxu0 %v354
    %v356 = vand.u32 %v84, 4294901760
    %v357 = vsub.f32 %v84, %v356
    %v358 = vand.u32 %v357, 4294901760
    %v359 = vsub.f32 %v357, %v358
    %v360 = vand.u32 %v359, 4294901760
    %361 = vmatpush1.msra.mxu0 %v360
    %v362 = vand.u32 %v89, 4294901760
    %v363 = vsub.f32 %v89, %v362
    %v364 = vand.u32 %v363, 4294901760
    %v365 = vsub.f32 %v363, %v364
    %v366 = vand.u32 %v365, 4294901760
    %367 = vmatprep.subr.mxu0 %v366
    %v368 = vand.u32 %v88, 4294901760
    %v369 = vsub.f32 %v88, %v368
    %v370 = vand.u32 %v369, 4294901760
    %v371 = vsub.f32 %v369, %v370
    %v372 = vand.u32 %v371, 4294901760
    %373 = vmatpush1.msra.mxu0 %v372
    %v374 = vand.u32 %v93, 4294901760
    %v375 = vsub.f32 %v93, %v374
    %v376 = vand.u32 %v375, 4294901760
    %v377 = vsub.f32 %v375, %v376
    %v378 = vand.u32 %v377, 4294901760
    %379 = vmatprep.subr.mxu0 %v378
    %v380 = vand.u32 %v92, 4294901760
    %v381 = vsub.f32 %v92, %v380
    %v382 = vand.u32 %v381, 4294901760
    %v383 = vsub.f32 %v381, %v382
    %v384 = vand.u32 %v383, 4294901760
    %385 = vmatpush1.msra.mxu0 %v384
    %v386 = vand.u32 %v97, 4294901760
    %v387 = vsub.f32 %v97, %v386
    %v388 = vand.u32 %v387, 4294901760
    %v389 = vsub.f32 %v387, %v388
    %v390 = vand.u32 %v389, 4294901760
    %391 = vmatprep.subr.mxu0 %v390
    %v392 = vand.u32 %v96, 4294901760
    %v393 = vsub.f32 %v96, %v392
    %v394 = vand.u32 %v393, 4294901760
    %v395 = vsub.f32 %v393, %v394
    %v396 = vand.u32 %v395, 4294901760
    %397 = vmatpush1.msra.mxu0 %v396
    %v398 = vand.u32 %v101, 4294901760
    %v399 = vsub.f32 %v101, %v398
    %v400 = vand.u32 %v399, 4294901760
    %v401 = vsub.f32 %v399, %v400
    %v402 = vand.u32 %v401, 4294901760
    %403 = vmatprep.subr.mxu0 %v402
    %v404 = vand.u32 %v100, 4294901760
    %v405 = vsub.f32 %v100, %v404
    %v406 = vand.u32 %v405, 4294901760
    %v407 = vsub.f32 %v405, %v406
    %v408 = vand.u32 %v407, 4294901760
    %409 = vmatpush1.msra.mxu0 %v408
    %v410 = vand.u32 %v105, 4294901760
    %v411 = vsub.f32 %v105, %v410
    %v412 = vand.u32 %v411, 4294901760
    %v413 = vsub.f32 %v411, %v412
    %v414 = vand.u32 %v413, 4294901760
    %415 = vmatprep.subr.mxu0 %v414
    %v416 = vand.u32 %v104, 4294901760
    %v417 = vsub.f32 %v104, %v416
    %v418 = vand.u32 %v417, 4294901760
    %v419 = vsub.f32 %v417, %v418
    %v420 = vand.u32 %v419, 4294901760
    %421 = vmatpush1.msra.mxu0 %v420
    %v422 = vand.u32 %v109, 4294901760
    %v423 = vsub.f32 %v109, %v422
    %v424 = vand.u32 %v423, 4294901760
    %v425 = vsub.f32 %v423, %v424
    %v426 = vand.u32 %v425, 4294901760
    %427 = vmatprep.subr.mxu0 %v426
    %v428 = vand.u32 %v108, 4294901760
    %v429 = vsub.f32 %v108, %v428
    %v430 = vand.u32 %v429, 4294901760
    %v431 = vsub.f32 %v429, %v430
    %v432 = vand.u32 %v431, 4294901760
    %433 = vmatpush1.msra.mxu0 %v432
    %434 = vmatprep.subr.mxu0 0.0
    %435 = vmatpush1.msra.mxu0 0.0
    %436 = vmatprep.subr.mxu0 0.0
    %437 = vmatpush1.msra.mxu0 0.0
    %438 = vmatprep.subr.mxu0 0.0
    %439 = vmatpush1.msra.mxu0 0.0
    %440 = vmatprep.subr.mxu0 0.0
    %441 = vmatpush1.msra.mxu0 0.0
    %442 = vmatprep.subr.mxu0 0.0
    %443 = vmatpush1.msra.mxu0 0.0
    %444 = vmatprep.subr.mxu0 0.0
    %445 = vmatpush1.msra.mxu0 0.0
    %446 = vmatprep.subr.mxu0 0.0
    %447 = vmatpush1.msra.mxu0 0.0
    %448 = vmatprep.subr.mxu0 0.0
    %449 = vmatpush1.msra.mxu0 0.0
    %450 = vmatprep.subr.mxu0 0.0
    %451 = vmatpush1.msra.mxu0 0.0
    %452 = vmatprep.subr.mxu0 0.0
    %453 = vmatpush1.msra.mxu0 0.0
    %454 = vmatprep.subr.mxu0 0.0
    %455 = vmatpush1.msra.mxu0 0.0
    %456 = vmatprep.subr.mxu0 0.0
    %457 = vmatpush1.msra.mxu0 0.0
    %458 = vmatprep.subr.mxu0 0.0
    %459 = vmatpush1.msra.mxu0 0.0
    %460 = vmatprep.subr.mxu0 0.0
    %461 = vmatpush1.msra.mxu0 0.0
    %462 = vmatprep.subr.mxu0 0.0
    %463 = vmatpush1.msra.mxu0 0.0
    %464 = vmatprep.subr.mxu0 0.0
    %465 = vmatpush1.msra.mxu0 0.0
    %466 = vmatprep.mubr.f32.mxu0 0.0
    %v467 = vand.u32 %v47, 4294901760
    %468 = vmatmul.mubr.f32.gmra.mrb[0].mxu0 %v467
    %v469 = vpop.f32.mrb[0].mxu0
    %v470 = vadd.f32 %v238, %v469
    %v471 = vpop.f32.mrb[0].mxu0
    %v472 = vadd.f32 %v240, %v471
    %473 = vdwg.mxu0
    %v474 = vand.u32 %v49, 4294901760
    %v475 = vsub.f32 %v49, %v474
    %476 = vmatprep.subr.mxu0 %v475
    %v477 = vand.u32 %v48, 4294901760
    %v478 = vsub.f32 %v48, %v477
    %479 = vmatpush1.msra.mxu0 %v478
    %v480 = vand.u32 %v53, 4294901760
    %v481 = vsub.f32 %v53, %v480
    %482 = vmatprep.subr.mxu0 %v481
    %v483 = vand.u32 %v52, 4294901760
    %v484 = vsub.f32 %v52, %v483
    %485 = vmatpush1.msra.mxu0 %v484
    %v486 = vand.u32 %v57, 4294901760
    %v487 = vsub.f32 %v57, %v486
    %488 = vmatprep.subr.mxu0 %v487
    %v489 = vand.u32 %v56, 4294901760
    %v490 = vsub.f32 %v56, %v489
    %491 = vmatpush1.msra.mxu0 %v490
    %v492 = vand.u32 %v61, 4294901760
    %v493 = vsub.f32 %v61, %v492
    %494 = vmatprep.subr.mxu0 %v493
    %v495 = vand.u32 %v60, 4294901760
    %v496 = vsub.f32 %v60, %v495
    %497 = vmatpush1.msra.mxu0 %v496
    %v498 = vand.u32 %v65, 4294901760
    %v499 = vsub.f32 %v65, %v498
    %500 = vmatprep.subr.mxu0 %v499
    %v501 = vand.u32 %v64, 4294901760
    %v502 = vsub.f32 %v64, %v501
    %503 = vmatpush1.msra.mxu0 %v502
    %v504 = vand.u32 %v69, 4294901760
    %v505 = vsub.f32 %v69, %v504
    %506 = vmatprep.subr.mxu0 %v505
    %v507 = vand.u32 %v68, 4294901760
    %v508 = vsub.f32 %v68, %v507
    %509 = vmatpush1.msra.mxu0 %v508
    %v510 = vand.u32 %v73, 4294901760
    %v511 = vsub.f32 %v73, %v510
    %512 = vmatprep.subr.mxu0 %v511
    %v513 = vand.u32 %v72, 4294901760
    %v514 = vsub.f32 %v72, %v513
    %515 = vmatpush1.msra.mxu0 %v514
    %v516 = vand.u32 %v77, 4294901760
    %v517 = vsub.f32 %v77, %v516
    %518 = vmatprep.subr.mxu0 %v517
    %v519 = vand.u32 %v76, 4294901760
    %v520 = vsub.f32 %v76, %v519
    %521 = vmatpush1.msra.mxu0 %v520
    %v522 = vand.u32 %v81, 4294901760
    %v523 = vsub.f32 %v81, %v522
    %524 = vmatprep.subr.mxu0 %v523
    %v525 = vand.u32 %v80, 4294901760
    %v526 = vsub.f32 %v80, %v525
    %527 = vmatpush1.msra.mxu0 %v526
    %v528 = vand.u32 %v85, 4294901760
    %v529 = vsub.f32 %v85, %v528
    %530 = vmatprep.subr.mxu0 %v529
    %v531 = vand.u32 %v84, 4294901760
    %v532 = vsub.f32 %v84, %v531
    %533 = vmatpush1.msra.mxu0 %v532
    %v534 = vand.u32 %v89, 4294901760
    %v535 = vsub.f32 %v89, %v534
    %536 = vmatprep.subr.mxu0 %v535
    %v537 = vand.u32 %v88, 4294901760
    %v538 = vsub.f32 %v88, %v537
    %539 = vmatpush1.msra.mxu0 %v538
    %v540 = vand.u32 %v93, 4294901760
    %v541 = vsub.f32 %v93, %v540
    %542 = vmatprep.subr.mxu0 %v541
    %v543 = vand.u32 %v92, 4294901760
    %v544 = vsub.f32 %v92, %v543
    %545 = vmatpush1.msra.mxu0 %v544
    %v546 = vand.u32 %v97, 4294901760
    %v547 = vsub.f32 %v97, %v546
    %548 = vmatprep.subr.mxu0 %v547
    %v549 = vand.u32 %v96, 4294901760
    %v550 = vsub.f32 %v96, %v549
    %551 = vmatpush1.msra.mxu0 %v550
    %v552 = vand.u32 %v101, 4294901760
    %v553 = vsub.f32 %v101, %v552
    %554 = vmatprep.subr.mxu0 %v553
    %v555 = vand.u32 %v100, 4294901760
    %v556 = vsub.f32 %v100, %v555
    %557 = vmatpush1.msra.mxu0 %v556
    %v558 = vand.u32 %v105, 4294901760
    %v559 = vsub.f32 %v105, %v558
    %560 = vmatprep.subr.mxu0 %v559
    %v561 = vand.u32 %v104, 4294901760
    %v562 = vsub.f32 %v104, %v561
    %563 = vmatpush1.msra.mxu0 %v562
    %v564 = vand.u32 %v109, 4294901760
    %v565 = vsub.f32 %v109, %v564
    %566 = vmatprep.subr.mxu0 %v565
    %v567 = vand.u32 %v108, 4294901760
    %v568 = vsub.f32 %v108, %v567
    %569 = vmatpush1.msra.mxu0 %v568
    %570 = vmatprep.subr.mxu0 0.0
    %571 = vmatpush1.msra.mxu0 0.0
    %572 = vmatprep.subr.mxu0 0.0
    %573 = vmatpush1.msra.mxu0 0.0
    %574 = vmatprep.subr.mxu0 0.0
    %575 = vmatpush1.msra.mxu0 0.0
    %576 = vmatprep.subr.mxu0 0.0
    %577 = vmatpush1.msra.mxu0 0.0
    %578 = vmatprep.subr.mxu0 0.0
    %579 = vmatpush1.msra.mxu0 0.0
    %580 = vmatprep.subr.mxu0 0.0
    %581 = vmatpush1.msra.mxu0 0.0
    %582 = vmatprep.subr.mxu0 0.0
    %583 = vmatpush1.msra.mxu0 0.0
    %584 = vmatprep.subr.mxu0 0.0
    %585 = vmatpush1.msra.mxu0 0.0
    %586 = vmatprep.subr.mxu0 0.0
    %587 = vmatpush1.msra.mxu0 0.0
    %588 = vmatprep.subr.mxu0 0.0
    %589 = vmatpush1.msra.mxu0 0.0
    %590 = vmatprep.subr.mxu0 0.0
    %591 = vmatpush1.msra.mxu0 0.0
    %592 = vmatprep.subr.mxu0 0.0
    %593 = vmatpush1.msra.mxu0 0.0
    %594 = vmatprep.subr.mxu0 0.0
    %595 = vmatpush1.msra.mxu0 0.0
    %596 = vmatprep.subr.mxu0 0.0
    %597 = vmatpush1.msra.mxu0 0.0
    %598 = vmatprep.subr.mxu0 0.0
    %599 = vmatpush1.msra.mxu0 0.0
    %600 = vmatprep.subr.mxu0 0.0
    %601 = vmatpush1.msra.mxu0 0.0
    %602 = vmatprep.mubr.f32.mxu0 0.0
    %v603 = vand.u32 %v47, 4294901760
    %v604 = vsub.f32 %v47, %v603
    %605 = vmatmul.mubr.f32.gmra.mrb[0].mxu0 %v604
    %v606 = vpop.f32.mrb[0].mxu0
    %v607 = vadd.f32 %v470, %v606
    %v608 = vpop.f32.mrb[0].mxu0
    %v609 = vadd.f32 %v472, %v608
    %610 = vdwg.mxu0
    %v611 = vand.u32 %v49, 4294901760
    %612 = vmatprep.subr.mxu0 %v611
    %v613 = vand.u32 %v48, 4294901760
    %614 = vmatpush1.msra.mxu0 %v613
    %v615 = vand.u32 %v53, 4294901760
    %616 = vmatprep.subr.mxu0 %v615
    %v617 = vand.u32 %v52, 4294901760
    %618 = vmatpush1.msra.mxu0 %v617
    %v619 = vand.u32 %v57, 4294901760
    %620 = vmatprep.subr.mxu0 %v619
    %v621 = vand.u32 %v56, 4294901760
    %622 = vmatpush1.msra.mxu0 %v621
    %v623 = vand.u32 %v61, 4294901760
    %624 = vmatprep.subr.mxu0 %v623
    %v625 = vand.u32 %v60, 4294901760
    %626 = vmatpush1.msra.mxu0 %v625
    %v627 = vand.u32 %v65, 4294901760
    %628 = vmatprep.subr.mxu0 %v627
    %v629 = vand.u32 %v64, 4294901760
    %630 = vmatpush1.msra.mxu0 %v629
    %v631 = vand.u32 %v69, 4294901760
    %632 = vmatprep.subr.mxu0 %v631
    %v633 = vand.u32 %v68, 4294901760
    %634 = vmatpush1.msra.mxu0 %v633
    %v635 = vand.u32 %v73, 4294901760
    %636 = vmatprep.subr.mxu0 %v635
    %v637 = vand.u32 %v72, 4294901760
    %638 = vmatpush1.msra.mxu0 %v637
    %v639 = vand.u32 %v77, 4294901760
    %640 = vmatprep.subr.mxu0 %v639
    %v641 = vand.u32 %v76, 4294901760
    %642 = vmatpush1.msra.mxu0 %v641
    %v643 = vand.u32 %v81, 4294901760
    %644 = vmatprep.subr.mxu0 %v643
    %v645 = vand.u32 %v80, 4294901760
    %646 = vmatpush1.msra.mxu0 %v645
    %v647 = vand.u32 %v85, 4294901760
    %648 = vmatprep.subr.mxu0 %v647
    %v649 = vand.u32 %v84, 4294901760
    %650 = vmatpush1.msra.mxu0 %v649
    %v651 = vand.u32 %v89, 4294901760
    %652 = vmatprep.subr.mxu0 %v651
    %v653 = vand.u32 %v88, 4294901760
    %654 = vmatpush1.msra.mxu0 %v653
    %v655 = vand.u32 %v93, 4294901760
    %656 = vmatprep.subr.mxu0 %v655
    %v657 = vand.u32 %v92, 4294901760
    %658 = vmatpush1.msra.mxu0 %v657
    %v659 = vand.u32 %v97, 4294901760
    %660 = vmatprep.subr.mxu0 %v659
    %v661 = vand.u32 %v96, 4294901760
    %662 = vmatpush1.msra.mxu0 %v661
    %v663 = vand.u32 %v101, 4294901760
    %664 = vmatprep.subr.mxu0 %v663
    %v665 = vand.u32 %v100, 4294901760
    %666 = vmatpush1.msra.mxu0 %v665
    %v667 = vand.u32 %v105, 4294901760
    %668 = vmatprep.subr.mxu0 %v667
    %v669 = vand.u32 %v104, 4294901760
    %670 = vmatpush1.msra.mxu0 %v669
    %v671 = vand.u32 %v109, 4294901760
    %672 = vmatprep.subr.mxu0 %v671
    %v673 = vand.u32 %v108, 4294901760
    %674 = vmatpush1.msra.mxu0 %v673
    %675 = vmatprep.subr.mxu0 0.0
    %676 = vmatpush1.msra.mxu0 0.0
    %677 = vmatprep.subr.mxu0 0.0
    %678 = vmatpush1.msra.mxu0 0.0
    %679 = vmatprep.subr.mxu0 0.0
    %680 = vmatpush1.msra.mxu0 0.0
    %681 = vmatprep.subr.mxu0 0.0
    %682 = vmatpush1.msra.mxu0 0.0
    %683 = vmatprep.subr.mxu0 0.0
    %684 = vmatpush1.msra.mxu0 0.0
    %685 = vmatprep.subr.mxu0 0.0
    %686 = vmatpush1.msra.mxu0 0.0
    %687 = vmatprep.subr.mxu0 0.0
    %688 = vmatpush1.msra.mxu0 0.0
    %689 = vmatprep.subr.mxu0 0.0
    %690 = vmatpush1.msra.mxu0 0.0
    %691 = vmatprep.subr.mxu0 0.0
    %692 = vmatpush1.msra.mxu0 0.0
    %693 = vmatprep.subr.mxu0 0.0
    %694 = vmatpush1.msra.mxu0 0.0
    %695 = vmatprep.subr.mxu0 0.0
    %696 = vmatpush1.msra.mxu0 0.0
    %697 = vmatprep.subr.mxu0 0.0
    %698 = vmatpush1.msra.mxu0 0.0
    %699 = vmatprep.subr.mxu0 0.0
    %700 = vmatpush1.msra.mxu0 0.0
    %701 = vmatprep.subr.mxu0 0.0
    %702 = vmatpush1.msra.mxu0 0.0
    %703 = vmatprep.subr.mxu0 0.0
    %704 = vmatpush1.msra.mxu0 0.0
    %705 = vmatprep.subr.mxu0 0.0
    %706 = vmatpush1.msra.mxu0 0.0
    %707 = vmatprep.mubr.f32.mxu0 0.0
    %v708 = vand.u32 %v47, 4294901760
    %v709 = vsub.f32 %v47, %v708
    %v710 = vand.u32 %v709, 4294901760
    %711 = vmatmul.mubr.f32.gmra.mrb[0].mxu0 %v710
    %v712 = vpop.f32.mrb[0].mxu0
    %v713 = vadd.f32 %v607, %v712
    %v714 = vpop.f32.mrb[0].mxu0
    %v715 = vadd.f32 %v609, %v714
    %716 = vdwg.mxu0
    %v717 = vand.u32 %v49, 4294901760
    %v718 = vsub.f32 %v49, %v717
    %v719 = vand.u32 %v718, 4294901760
    %720 = vmatprep.subr.mxu0 %v719
    %v721 = vand.u32 %v48, 4294901760
    %v722 = vsub.f32 %v48, %v721
    %v723 = vand.u32 %v722, 4294901760
    %724 = vmatpush1.msra.mxu0 %v723
    %v725 = vand.u32 %v53, 4294901760
    %v726 = vsub.f32 %v53, %v725
    %v727 = vand.u32 %v726, 4294901760
    %728 = vmatprep.subr.mxu0 %v727
    %v729 = vand.u32 %v52, 4294901760
    %v730 = vsub.f32 %v52, %v729
    %v731 = vand.u32 %v730, 4294901760
    %732 = vmatpush1.msra.mxu0 %v731
    %v733 = vand.u32 %v57, 4294901760
    %v734 = vsub.f32 %v57, %v733
    %v735 = vand.u32 %v734, 4294901760
    %736 = vmatprep.subr.mxu0 %v735
    %v737 = vand.u32 %v56, 4294901760
    %v738 = vsub.f32 %v56, %v737
    %v739 = vand.u32 %v738, 4294901760
    %740 = vmatpush1.msra.mxu0 %v739
    %v741 = vand.u32 %v61, 4294901760
    %v742 = vsub.f32 %v61, %v741
    %v743 = vand.u32 %v742, 4294901760
    %744 = vmatprep.subr.mxu0 %v743
    %v745 = vand.u32 %v60, 4294901760
    %v746 = vsub.f32 %v60, %v745
    %v747 = vand.u32 %v746, 4294901760
    %748 = vmatpush1.msra.mxu0 %v747
    %v749 = vand.u32 %v65, 4294901760
    %v750 = vsub.f32 %v65, %v749
    %v751 = vand.u32 %v750, 4294901760
    %752 = vmatprep.subr.mxu0 %v751
    %v753 = vand.u32 %v64, 4294901760
    %v754 = vsub.f32 %v64, %v753
    %v755 = vand.u32 %v754, 4294901760
    %756 = vmatpush1.msra.mxu0 %v755
    %v757 = vand.u32 %v69, 4294901760
    %v758 = vsub.f32 %v69, %v757
    %v759 = vand.u32 %v758, 4294901760
    %760 = vmatprep.subr.mxu0 %v759
    %v761 = vand.u32 %v68, 4294901760
    %v762 = vsub.f32 %v68, %v761
    %v763 = vand.u32 %v762, 4294901760
    %764 = vmatpush1.msra.mxu0 %v763
    %v765 = vand.u32 %v73, 4294901760
    %v766 = vsub.f32 %v73, %v765
    %v767 = vand.u32 %v766, 4294901760
    %768 = vmatprep.subr.mxu0 %v767
    %v769 = vand.u32 %v72, 4294901760
    %v770 = vsub.f32 %v72, %v769
    %v771 = vand.u32 %v770, 4294901760
    %772 = vmatpush1.msra.mxu0 %v771
    %v773 = vand.u32 %v77, 4294901760
    %v774 = vsub.f32 %v77, %v773
    %v775 = vand.u32 %v774, 4294901760
    %776 = vmatprep.subr.mxu0 %v775
    %v777 = vand.u32 %v76, 4294901760
    %v778 = vsub.f32 %v76, %v777
    %v779 = vand.u32 %v778, 4294901760
    %780 = vmatpush1.msra.mxu0 %v779
    %v781 = vand.u32 %v81, 4294901760
    %v782 = vsub.f32 %v81, %v781
    %v783 = vand.u32 %v782, 4294901760
    %784 = vmatprep.subr.mxu0 %v783
    %v785 = vand.u32 %v80, 4294901760
    %v786 = vsub.f32 %v80, %v785
    %v787 = vand.u32 %v786, 4294901760
    %788 = vmatpush1.msra.mxu0 %v787
    %v789 = vand.u32 %v85, 4294901760
    %v790 = vsub.f32 %v85, %v789
    %v791 = vand.u32 %v790, 4294901760
    %792 = vmatprep.subr.mxu0 %v791
    %v793 = vand.u32 %v84, 4294901760
    %v794 = vsub.f32 %v84, %v793
    %v795 = vand.u32 %v794, 4294901760
    %796 = vmatpush1.msra.mxu0 %v795
    %v797 = vand.u32 %v89, 4294901760
    %v798 = vsub.f32 %v89, %v797
    %v799 = vand.u32 %v798, 4294901760
    %800 = vmatprep.subr.mxu0 %v799
    %v801 = vand.u32 %v88, 4294901760
    %v802 = vsub.f32 %v88, %v801
    %v803 = vand.u32 %v802, 4294901760
    %804 = vmatpush1.msra.mxu0 %v803
    %v805 = vand.u32 %v93, 4294901760
    %v806 = vsub.f32 %v93, %v805
    %v807 = vand.u32 %v806, 4294901760
    %808 = vmatprep.subr.mxu0 %v807
    %v809 = vand.u32 %v92, 4294901760
    %v810 = vsub.f32 %v92, %v809
    %v811 = vand.u32 %v810, 4294901760
    %812 = vmatpush1.msra.mxu0 %v811
    %v813 = vand.u32 %v97, 4294901760
    %v814 = vsub.f32 %v97, %v813
    %v815 = vand.u32 %v814, 4294901760
    %816 = vmatprep.subr.mxu0 %v815
    %v817 = vand.u32 %v96, 4294901760
    %v818 = vsub.f32 %v96, %v817
    %v819 = vand.u32 %v818, 4294901760
    %820 = vmatpush1.msra.mxu0 %v819
    %v821 = vand.u32 %v101, 4294901760
    %v822 = vsub.f32 %v101, %v821
    %v823 = vand.u32 %v822, 4294901760
    %824 = vmatprep.subr.mxu0 %v823
    %v825 = vand.u32 %v100, 4294901760
    %v826 = vsub.f32 %v100, %v825
    %v827 = vand.u32 %v826, 4294901760
    %828 = vmatpush1.msra.mxu0 %v827
    %v829 = vand.u32 %v105, 4294901760
    %v830 = vsub.f32 %v105, %v829
    %v831 = vand.u32 %v830, 4294901760
    %832 = vmatprep.subr.mxu0 %v831
    %v833 = vand.u32 %v104, 4294901760
    %v834 = vsub.f32 %v104, %v833
    %v835 = vand.u32 %v834, 4294901760
    %836 = vmatpush1.msra.mxu0 %v835
    %v837 = vand.u32 %v109, 4294901760
    %v838 = vsub.f32 %v109, %v837
    %v839 = vand.u32 %v838, 4294901760
    %840 = vmatprep.subr.mxu0 %v839
    %v841 = vand.u32 %v108, 4294901760
    %v842 = vsub.f32 %v108, %v841
    %v843 = vand.u32 %v842, 4294901760
    %844 = vmatpush1.msra.mxu0 %v843
    %845 = vmatprep.subr.mxu0 0.0
    %846 = vmatpush1.msra.mxu0 0.0
    %847 = vmatprep.subr.mxu0 0.0
    %848 = vmatpush1.msra.mxu0 0.0
    %849 = vmatprep.subr.mxu0 0.0
    %850 = vmatpush1.msra.mxu0 0.0
    %851 = vmatprep.subr.mxu0 0.0
    %852 = vmatpush1.msra.mxu0 0.0
    %853 = vmatprep.subr.mxu0 0.0
    %854 = vmatpush1.msra.mxu0 0.0
    %855 = vmatprep.subr.mxu0 0.0
    %856 = vmatpush1.msra.mxu0 0.0
    %857 = vmatprep.subr.mxu0 0.0
    %858 = vmatpush1.msra.mxu0 0.0
    %859 = vmatprep.subr.mxu0 0.0
    %860 = vmatpush1.msra.mxu0 0.0
    %861 = vmatprep.subr.mxu0 0.0
    %862 = vmatpush1.msra.mxu0 0.0
    %863 = vmatprep.subr.mxu0 0.0
    %864 = vmatpush1.msra.mxu0 0.0
    %865 = vmatprep.subr.mxu0 0.0
    %866 = vmatpush1.msra.mxu0 0.0
    %867 = vmatprep.subr.mxu0 0.0
    %868 = vmatpush1.msra.mxu0 0.0
    %869 = vmatprep.subr.mxu0 0.0
    %870 = vmatpush1.msra.mxu0 0.0
    %871 = vmatprep.subr.mxu0 0.0
    %872 = vmatpush1.msra.mxu0 0.0
    %873 = vmatprep.subr.mxu0 0.0
    %874 = vmatpush1.msra.mxu0 0.0
    %875 = vmatprep.subr.mxu0 0.0
    %876 = vmatpush1.msra.mxu0 0.0
    %877 = vmatprep.mubr.f32.mxu0 0.0
    %v878 = vand.u32 %v47, 4294901760
    %879 = vmatmul.mubr.f32.gmra.mrb[0].mxu0 %v878
    %v880 = vpop.f32.mrb[0].mxu0
    %v881 = vadd.f32 %v713, %v880
    %v882 = vpop.f32.mrb[0].mxu0
    %v883 = vadd.f32 %v715, %v882
    %884 = vdwg.mxu0
    %v885 = vand.u32 %v49, 4294901760
    %886 = vmatprep.subr.mxu0 %v885
    %v887 = vand.u32 %v48, 4294901760
    %888 = vmatpush1.msra.mxu0 %v887
    %v889 = vand.u32 %v53, 4294901760
    %890 = vmatprep.subr.mxu0 %v889
    %v891 = vand.u32 %v52, 4294901760
    %892 = vmatpush1.msra.mxu0 %v891
    %v893 = vand.u32 %v57, 4294901760
    %894 = vmatprep.subr.mxu0 %v893
    %v895 = vand.u32 %v56, 4294901760
    %896 = vmatpush1.msra.mxu0 %v895
    %v897 = vand.u32 %v61, 4294901760
    %898 = vmatprep.subr.mxu0 %v897
    %v899 = vand.u32 %v60, 4294901760
    %900 = vmatpush1.msra.mxu0 %v899
    %v901 = vand.u32 %v65, 4294901760
    %902 = vmatprep.subr.mxu0 %v901
    %v903 = vand.u32 %v64, 4294901760
    %904 = vmatpush1.msra.mxu0 %v903
    %v905 = vand.u32 %v69, 4294901760
    %906 = vmatprep.subr.mxu0 %v905
    %v907 = vand.u32 %v68, 4294901760
    %908 = vmatpush1.msra.mxu0 %v907
    %v909 = vand.u32 %v73, 4294901760
    %910 = vmatprep.subr.mxu0 %v909
    %v911 = vand.u32 %v72, 4294901760
    %912 = vmatpush1.msra.mxu0 %v911
    %v913 = vand.u32 %v77, 4294901760
    %914 = vmatprep.subr.mxu0 %v913
    %v915 = vand.u32 %v76, 4294901760
    %916 = vmatpush1.msra.mxu0 %v915
    %v917 = vand.u32 %v81, 4294901760
    %918 = vmatprep.subr.mxu0 %v917
    %v919 = vand.u32 %v80, 4294901760
    %920 = vmatpush1.msra.mxu0 %v919
    %v921 = vand.u32 %v85, 4294901760
    %922 = vmatprep.subr.mxu0 %v921
    %v923 = vand.u32 %v84, 4294901760
    %924 = vmatpush1.msra.mxu0 %v923
    %v925 = vand.u32 %v89, 4294901760
    %926 = vmatprep.subr.mxu0 %v925
    %v927 = vand.u32 %v88, 4294901760
    %928 = vmatpush1.msra.mxu0 %v927
    %v929 = vand.u32 %v93, 4294901760
    %930 = vmatprep.subr.mxu0 %v929
    %v931 = vand.u32 %v92, 4294901760
    %932 = vmatpush1.msra.mxu0 %v931
    %v933 = vand.u32 %v97, 4294901760
    %934 = vmatprep.subr.mxu0 %v933
    %v935 = vand.u32 %v96, 4294901760
    %936 = vmatpush1.msra.mxu0 %v935
    %v937 = vand.u32 %v101, 4294901760
    %938 = vmatprep.subr.mxu0 %v937
    %v939 = vand.u32 %v100, 4294901760
    %940 = vmatpush1.msra.mxu0 %v939
    %v941 = vand.u32 %v105, 4294901760
    %942 = vmatprep.subr.mxu0 %v941
    %v943 = vand.u32 %v104, 4294901760
    %944 = vmatpush1.msra.mxu0 %v943
    %v945 = vand.u32 %v109, 4294901760
    %946 = vmatprep.subr.mxu0 %v945
    %v947 = vand.u32 %v108, 4294901760
    %948 = vmatpush1.msra.mxu0 %v947
    %949 = vmatprep.subr.mxu0 0.0
    %950 = vmatpush1.msra.mxu0 0.0
    %951 = vmatprep.subr.mxu0 0.0
    %952 = vmatpush1.msra.mxu0 0.0
    %953 = vmatprep.subr.mxu0 0.0
    %954 = vmatpush1.msra.mxu0 0.0
    %955 = vmatprep.subr.mxu0 0.0
    %956 = vmatpush1.msra.mxu0 0.0
    %957 = vmatprep.subr.mxu0 0.0
    %958 = vmatpush1.msra.mxu0 0.0
    %959 = vmatprep.subr.mxu0 0.0
    %960 = vmatpush1.msra.mxu0 0.0
    %961 = vmatprep.subr.mxu0 0.0
    %962 = vmatpush1.msra.mxu0 0.0
    %963 = vmatprep.subr.mxu0 0.0
    %964 = vmatpush1.msra.mxu0 0.0
    %965 = vmatprep.subr.mxu0 0.0
    %966 = vmatpush1.msra.mxu0 0.0
    %967 = vmatprep.subr.mxu0 0.0
    %968 = vmatpush1.msra.mxu0 0.0
    %969 = vmatprep.subr.mxu0 0.0
    %970 = vmatpush1.msra.mxu0 0.0
    %971 = vmatprep.subr.mxu0 0.0
    %972 = vmatpush1.msra.mxu0 0.0
    %973 = vmatprep.subr.mxu0 0.0
    %974 = vmatpush1.msra.mxu0 0.0
    %975 = vmatprep.subr.mxu0 0.0
    %976 = vmatpush1.msra.mxu0 0.0
    %977 = vmatprep.subr.mxu0 0.0
    %978 = vmatpush1.msra.mxu0 0.0
    %979 = vmatprep.subr.mxu0 0.0
    %980 = vmatpush1.msra.mxu0 0.0
    %981 = vmatprep.mubr.f32.mxu0 0.0
    %v982 = vand.u32 %v47, 4294901760
    %983 = vmatmul.mubr.f32.gmra.mrb[0].mxu0 %v982
    %v984 = vpop.f32.mrb[0].mxu0
    %v985 = vadd.f32 %v881, %v984
    %v986 = vpop.f32.mrb[0].mxu0
    %v987 = vadd.f32 %v883, %v986
    %988 = vdwg.mxu0
    %v989 = vand.u32 %v51, 4294901760
    %990 = vmatprep.subr.mxu0 %v989
    %v991 = vand.u32 %v50, 4294901760
    %992 = vmatpush1.msra.mxu0 %v991
    %v993 = vand.u32 %v55, 4294901760
    %994 = vmatprep.subr.mxu0 %v993
    %v995 = vand.u32 %v54, 4294901760
    %996 = vmatpush1.msra.mxu0 %v995
    %v997 = vand.u32 %v59, 4294901760
    %998 = vmatprep.subr.mxu0 %v997
    %v999 = vand.u32 %v58, 4294901760
    %1000 = vmatpush1.msra.mxu0 %v999
    %v1001 = vand.u32 %v63, 4294901760
    %1002 = vmatprep.subr.mxu0 %v1001
    %v1003 = vand.u32 %v62, 4294901760
    %1004 = vmatpush1.msra.mxu0 %v1003
    %v1005 = vand.u32 %v67, 4294901760
    %1006 = vmatprep.subr.mxu0 %v1005
    %v1007 = vand.u32 %v66, 4294901760
    %1008 = vmatpush1.msra.mxu0 %v1007
    %v1009 = vand.u32 %v71, 4294901760
    %1010 = vmatprep.subr.mxu0 %v1009
    %v1011 = vand.u32 %v70, 4294901760
    %1012 = vmatpush1.msra.mxu0 %v1011
    %v1013 = vand.u32 %v75, 4294901760
    %1014 = vmatprep.subr.mxu0 %v1013
    %v1015 = vand.u32 %v74, 4294901760
    %1016 = vmatpush1.msra.mxu0 %v1015
    %v1017 = vand.u32 %v79, 4294901760
    %1018 = vmatprep.subr.mxu0 %v1017
    %v1019 = vand.u32 %v78, 4294901760
    %1020 = vmatpush1.msra.mxu0 %v1019
    %v1021 = vand.u32 %v83, 4294901760
    %1022 = vmatprep.subr.mxu0 %v1021
    %v1023 = vand.u32 %v82, 4294901760
    %1024 = vmatpush1.msra.mxu0 %v1023
    %v1025 = vand.u32 %v87, 4294901760
    %1026 = vmatprep.subr.mxu0 %v1025
    %v1027 = vand.u32 %v86, 4294901760
    %1028 = vmatpush1.msra.mxu0 %v1027
    %v1029 = vand.u32 %v91, 4294901760
    %1030 = vmatprep.subr.mxu0 %v1029
    %v1031 = vand.u32 %v90, 4294901760
    %1032 = vmatpush1.msra.mxu0 %v1031
    %v1033 = vand.u32 %v95, 4294901760
    %1034 = vmatprep.subr.mxu0 %v1033
    %v1035 = vand.u32 %v94, 4294901760
    %1036 = vmatpush1.msra.mxu0 %v1035
    %v1037 = vand.u32 %v99, 4294901760
    %1038 = vmatprep.subr.mxu0 %v1037
    %v1039 = vand.u32 %v98, 4294901760
    %1040 = vmatpush1.msra.mxu0 %v1039
    %v1041 = vand.u32 %v103, 4294901760
    %1042 = vmatprep.subr.mxu0 %v1041
    %v1043 = vand.u32 %v102, 4294901760
    %1044 = vmatpush1.msra.mxu0 %v1043
    %v1045 = vand.u32 %v107, 4294901760
    %1046 = vmatprep.subr.mxu0 %v1045
    %v1047 = vand.u32 %v106, 4294901760
    %1048 = vmatpush1.msra.mxu0 %v1047
    %v1049 = vand.u32 %v111, 4294901760
    %1050 = vmatprep.subr.mxu0 %v1049
    %v1051 = vand.u32 %v110, 4294901760
    %1052 = vmatpush1.msra.mxu0 %v1051
    %1053 = vmatprep.subr.mxu0 0.0
    %1054 = vmatpush1.msra.mxu0 0.0
    %1055 = vmatprep.subr.mxu0 0.0
    %1056 = vmatpush1.msra.mxu0 0.0
    %1057 = vmatprep.subr.mxu0 0.0
    %1058 = vmatpush1.msra.mxu0 0.0
    %1059 = vmatprep.subr.mxu0 0.0
    %1060 = vmatpush1.msra.mxu0 0.0
    %1061 = vmatprep.subr.mxu0 0.0
    %1062 = vmatpush1.msra.mxu0 0.0
    %1063 = vmatprep.subr.mxu0 0.0
    %1064 = vmatpush1.msra.mxu0 0.0
    %1065 = vmatprep.subr.mxu0 0.0
    %1066 = vmatpush1.msra.mxu0 0.0
    %1067 = vmatprep.subr.mxu0 0.0
    %1068 = vmatpush1.msra.mxu0 0.0
    %1069 = vmatprep.subr.mxu0 0.0
    %1070 = vmatpush1.msra.mxu0 0.0
    %1071 = vmatprep.subr.mxu0 0.0
    %1072 = vmatpush1.msra.mxu0 0.0
    %1073 = vmatprep.subr.mxu0 0.0
    %1074 = vmatpush1.msra.mxu0 0.0
    %1075 = vmatprep.subr.mxu0 0.0
    %1076 = vmatpush1.msra.mxu0 0.0
    %1077 = vmatprep.subr.mxu0 0.0
    %1078 = vmatpush1.msra.mxu0 0.0
    %1079 = vmatprep.subr.mxu0 0.0
    %1080 = vmatpush1.msra.mxu0 0.0
    %1081 = vmatprep.subr.mxu0 0.0
    %1082 = vmatpush1.msra.mxu0 0.0
    %1083 = vmatprep.subr.mxu0 0.0
    %1084 = vmatpush1.msra.mxu0 0.0
    %1085 = vmatprep.mubr.f32.mxu0 0.0
    %v1086 = vand.u32 %v47, 4294901760
    %v1087 = vsub.f32 %v47, %v1086
    %v1088 = vand.u32 %v1087, 4294901760
    %v1089 = vsub.f32 %v1087, %v1088
    %v1090 = vand.u32 %v1089, 4294901760
    %1091 = vmatmul.mubr.f32.gmra.mrb[0].mxu0 %v1090
    %v1092 = vpop.f32.mrb[0].mxu0
    %v1093 = vadd.f32 %v125, %v1092
    %v1094 = vpop.f32.mrb[0].mxu0
    %v1095 = vadd.f32 %v129, %v1094
    %1096 = vdwg.mxu0
    %v1097 = vand.u32 %v51, 4294901760
    %v1098 = vsub.f32 %v51, %v1097
    %v1099 = vand.u32 %v1098, 4294901760
    %v1100 = vsub.f32 %v1098, %v1099
    %v1101 = vand.u32 %v1100, 4294901760
    %1102 = vmatprep.subr.mxu0 %v1101
    %v1103 = vand.u32 %v50, 4294901760
    %v1104 = vsub.f32 %v50, %v1103
    %v1105 = vand.u32 %v1104, 4294901760
    %v1106 = vsub.f32 %v1104, %v1105
    %v1107 = vand.u32 %v1106, 4294901760
    %1108 = vmatpush1.msra.mxu0 %v1107
    %v1109 = vand.u32 %v55, 4294901760
    %v1110 = vsub.f32 %v55, %v1109
    %v1111 = vand.u32 %v1110, 4294901760
    %v1112 = vsub.f32 %v1110, %v1111
    %v1113 = vand.u32 %v1112, 4294901760
    %1114 = vmatprep.subr.mxu0 %v1113
    %v1115 = vand.u32 %v54, 4294901760
    %v1116 = vsub.f32 %v54, %v1115
    %v1117 = vand.u32 %v1116, 4294901760
    %v1118 = vsub.f32 %v1116, %v1117
    %v1119 = vand.u32 %v1118, 4294901760
    %1120 = vmatpush1.msra.mxu0 %v1119
    %v1121 = vand.u32 %v59, 4294901760
    %v1122 = vsub.f32 %v59, %v1121
    %v1123 = vand.u32 %v1122, 4294901760
    %v1124 = vsub.f32 %v1122, %v1123
    %v1125 = vand.u32 %v1124, 4294901760
    %1126 = vmatprep.subr.mxu0 %v1125
    %v1127 = vand.u32 %v58, 4294901760
    %v1128 = vsub.f32 %v58, %v1127
    %v1129 = vand.u32 %v1128, 4294901760
    %v1130 = vsub.f32 %v1128, %v1129
    %v1131 = vand.u32 %v1130, 4294901760
    %1132 = vmatpush1.msra.mxu0 %v1131
    %v1133 = vand.u32 %v63, 4294901760
    %v1134 = vsub.f32 %v63, %v1133
    %v1135 = vand.u32 %v1134, 4294901760
    %v1136 = vsub.f32 %v1134, %v1135
    %v1137 = vand.u32 %v1136, 4294901760
    %1138 = vmatprep.subr.mxu0 %v1137
    %v1139 = vand.u32 %v62, 4294901760
    %v1140 = vsub.f32 %v62, %v1139
    %v1141 = vand.u32 %v1140, 4294901760
    %v1142 = vsub.f32 %v1140, %v1141
    %v1143 = vand.u32 %v1142, 4294901760
    %1144 = vmatpush1.msra.mxu0 %v1143
    %v1145 = vand.u32 %v67, 4294901760
    %v1146 = vsub.f32 %v67, %v1145
    %v1147 = vand.u32 %v1146, 4294901760
    %v1148 = vsub.f32 %v1146, %v1147
    %v1149 = vand.u32 %v1148, 4294901760
    %1150 = vmatprep.subr.mxu0 %v1149
    %v1151 = vand.u32 %v66, 4294901760
    %v1152 = vsub.f32 %v66, %v1151
    %v1153 = vand.u32 %v1152, 4294901760
    %v1154 = vsub.f32 %v1152, %v1153
    %v1155 = vand.u32 %v1154, 4294901760
    %1156 = vmatpush1.msra.mxu0 %v1155
    %v1157 = vand.u32 %v71, 4294901760
    %v1158 = vsub.f32 %v71, %v1157
    %v1159 = vand.u32 %v1158, 4294901760
    %v1160 = vsub.f32 %v1158, %v1159
    %v1161 = vand.u32 %v1160, 4294901760
    %1162 = vmatprep.subr.mxu0 %v1161
    %v1163 = vand.u32 %v70, 4294901760
    %v1164 = vsub.f32 %v70, %v1163
    %v1165 = vand.u32 %v1164, 4294901760
    %v1166 = vsub.f32 %v1164, %v1165
    %v1167 = vand.u32 %v1166, 4294901760
    %1168 = vmatpush1.msra.mxu0 %v1167
    %v1169 = vand.u32 %v75, 4294901760
    %v1170 = vsub.f32 %v75, %v1169
    %v1171 = vand.u32 %v1170, 4294901760
    %v1172 = vsub.f32 %v1170, %v1171
    %v1173 = vand.u32 %v1172, 4294901760
    %1174 = vmatprep.subr.mxu0 %v1173
    %v1175 = vand.u32 %v74, 4294901760
    %v1176 = vsub.f32 %v74, %v1175
    %v1177 = vand.u32 %v1176, 4294901760
    %v1178 = vsub.f32 %v1176, %v1177
    %v1179 = vand.u32 %v1178, 4294901760
    %1180 = vmatpush1.msra.mxu0 %v1179
    %v1181 = vand.u32 %v79, 4294901760
    %v1182 = vsub.f32 %v79, %v1181
    %v1183 = vand.u32 %v1182, 4294901760
    %v1184 = vsub.f32 %v1182, %v1183
    %v1185 = vand.u32 %v1184, 4294901760
    %1186 = vmatprep.subr.mxu0 %v1185
    %v1187 = vand.u32 %v78, 4294901760
    %v1188 = vsub.f32 %v78, %v1187
    %v1189 = vand.u32 %v1188, 4294901760
    %v1190 = vsub.f32 %v1188, %v1189
    %v1191 = vand.u32 %v1190, 4294901760
    %1192 = vmatpush1.msra.mxu0 %v1191
    %v1193 = vand.u32 %v83, 4294901760
    %v1194 = vsub.f32 %v83, %v1193
    %v1195 = vand.u32 %v1194, 4294901760
    %v1196 = vsub.f32 %v1194, %v1195
    %v1197 = vand.u32 %v1196, 4294901760
    %1198 = vmatprep.subr.mxu0 %v1197
    %v1199 = vand.u32 %v82, 4294901760
    %v1200 = vsub.f32 %v82, %v1199
    %v1201 = vand.u32 %v1200, 4294901760
    %v1202 = vsub.f32 %v1200, %v1201
    %v1203 = vand.u32 %v1202, 4294901760
    %1204 = vmatpush1.msra.mxu0 %v1203
    %v1205 = vand.u32 %v87, 4294901760
    %v1206 = vsub.f32 %v87, %v1205
    %v1207 = vand.u32 %v1206, 4294901760
    %v1208 = vsub.f32 %v1206, %v1207
    %v1209 = vand.u32 %v1208, 4294901760
    %1210 = vmatprep.subr.mxu0 %v1209
    %v1211 = vand.u32 %v86, 4294901760
    %v1212 = vsub.f32 %v86, %v1211
    %v1213 = vand.u32 %v1212, 4294901760
    %v1214 = vsub.f32 %v1212, %v1213
    %v1215 = vand.u32 %v1214, 4294901760
    %1216 = vmatpush1.msra.mxu0 %v1215
    %v1217 = vand.u32 %v91, 4294901760
    %v1218 = vsub.f32 %v91, %v1217
    %v1219 = vand.u32 %v1218, 4294901760
    %v1220 = vsub.f32 %v1218, %v1219
    %v1221 = vand.u32 %v1220, 4294901760
    %1222 = vmatprep.subr.mxu0 %v1221
    %v1223 = vand.u32 %v90, 4294901760
    %v1224 = vsub.f32 %v90, %v1223
    %v1225 = vand.u32 %v1224, 4294901760
    %v1226 = vsub.f32 %v1224, %v1225
    %v1227 = vand.u32 %v1226, 4294901760
    %1228 = vmatpush1.msra.mxu0 %v1227
    %v1229 = vand.u32 %v95, 4294901760
    %v1230 = vsub.f32 %v95, %v1229
    %v1231 = vand.u32 %v1230, 4294901760
    %v1232 = vsub.f32 %v1230, %v1231
    %v1233 = vand.u32 %v1232, 4294901760
    %1234 = vmatprep.subr.mxu0 %v1233
    %v1235 = vand.u32 %v94, 4294901760
    %v1236 = vsub.f32 %v94, %v1235
    %v1237 = vand.u32 %v1236, 4294901760
    %v1238 = vsub.f32 %v1236, %v1237
    %v1239 = vand.u32 %v1238, 4294901760
    %1240 = vmatpush1.msra.mxu0 %v1239
    %v1241 = vand.u32 %v99, 4294901760
    %v1242 = vsub.f32 %v99, %v1241
    %v1243 = vand.u32 %v1242, 4294901760
    %v1244 = vsub.f32 %v1242, %v1243
    %v1245 = vand.u32 %v1244, 4294901760
    %1246 = vmatprep.subr.mxu0 %v1245
    %v1247 = vand.u32 %v98, 4294901760
    %v1248 = vsub.f32 %v98, %v1247
    %v1249 = vand.u32 %v1248, 4294901760
    %v1250 = vsub.f32 %v1248, %v1249
    %v1251 = vand.u32 %v1250, 4294901760
    %1252 = vmatpush1.msra.mxu0 %v1251
    %v1253 = vand.u32 %v103, 4294901760
    %v1254 = vsub.f32 %v103, %v1253
    %v1255 = vand.u32 %v1254, 4294901760
    %v1256 = vsub.f32 %v1254, %v1255
    %v1257 = vand.u32 %v1256, 4294901760
    %1258 = vmatprep.subr.mxu0 %v1257
    %v1259 = vand.u32 %v102, 4294901760
    %v1260 = vsub.f32 %v102, %v1259
    %v1261 = vand.u32 %v1260, 4294901760
    %v1262 = vsub.f32 %v1260, %v1261
    %v1263 = vand.u32 %v1262, 4294901760
    %1264 = vmatpush1.msra.mxu0 %v1263
    %v1265 = vand.u32 %v107, 4294901760
    %v1266 = vsub.f32 %v107, %v1265
    %v1267 = vand.u32 %v1266, 4294901760
    %v1268 = vsub.f32 %v1266, %v1267
    %v1269 = vand.u32 %v1268, 4294901760
    %1270 = vmatprep.subr.mxu0 %v1269
    %v1271 = vand.u32 %v106, 4294901760
    %v1272 = vsub.f32 %v106, %v1271
    %v1273 = vand.u32 %v1272, 4294901760
    %v1274 = vsub.f32 %v1272, %v1273
    %v1275 = vand.u32 %v1274, 4294901760
    %1276 = vmatpush1.msra.mxu0 %v1275
    %v1277 = vand.u32 %v111, 4294901760
    %v1278 = vsub.f32 %v111, %v1277
    %v1279 = vand.u32 %v1278, 4294901760
    %v1280 = vsub.f32 %v1278, %v1279
    %v1281 = vand.u32 %v1280, 4294901760
    %1282 = vmatprep.subr.mxu0 %v1281
    %v1283 = vand.u32 %v110, 4294901760
    %v1284 = vsub.f32 %v110, %v1283
    %v1285 = vand.u32 %v1284, 4294901760
    %v1286 = vsub.f32 %v1284, %v1285
    %v1287 = vand.u32 %v1286, 4294901760
    %1288 = vmatpush1.msra.mxu0 %v1287
    %1289 = vmatprep.subr.mxu0 0.0
    %1290 = vmatpush1.msra.mxu0 0.0
    %1291 = vmatprep.subr.mxu0 0.0
    %1292 = vmatpush1.msra.mxu0 0.0
    %1293 = vmatprep.subr.mxu0 0.0
    %1294 = vmatpush1.msra.mxu0 0.0
    %1295 = vmatprep.subr.mxu0 0.0
    %1296 = vmatpush1.msra.mxu0 0.0
    %1297 = vmatprep.subr.mxu0 0.0
    %1298 = vmatpush1.msra.mxu0 0.0
    %1299 = vmatprep.subr.mxu0 0.0
    %1300 = vmatpush1.msra.mxu0 0.0
    %1301 = vmatprep.subr.mxu0 0.0
    %1302 = vmatpush1.msra.mxu0 0.0
    %1303 = vmatprep.subr.mxu0 0.0
    %1304 = vmatpush1.msra.mxu0 0.0
    %1305 = vmatprep.subr.mxu0 0.0
    %1306 = vmatpush1.msra.mxu0 0.0
    %1307 = vmatprep.subr.mxu0 0.0
    %1308 = vmatpush1.msra.mxu0 0.0
    %1309 = vmatprep.subr.mxu0 0.0
    %1310 = vmatpush1.msra.mxu0 0.0
    %1311 = vmatprep.subr.mxu0 0.0
    %1312 = vmatpush1.msra.mxu0 0.0
    %1313 = vmatprep.subr.mxu0 0.0
    %1314 = vmatpush1.msra.mxu0 0.0
    %1315 = vmatprep.subr.mxu0 0.0
    %1316 = vmatpush1.msra.mxu0 0.0
    %1317 = vmatprep.subr.mxu0 0.0
    %1318 = vmatpush1.msra.mxu0 0.0
    %1319 = vmatprep.subr.mxu0 0.0
    %1320 = vmatpush1.msra.mxu0 0.0
    %1321 = vmatprep.mubr.f32.mxu0 0.0
    %v1322 = vand.u32 %v47, 4294901760
    %1323 = vmatmul.mubr.f32.gmra.mrb[0].mxu0 %v1322
    %v1324 = vpop.f32.mrb[0].mxu0
    %v1325 = vadd.f32 %v1093, %v1324
    %v1326 = vpop.f32.mrb[0].mxu0
    %v1327 = vadd.f32 %v1095, %v1326
    %1328 = vdwg.mxu0
    %v1329 = vand.u32 %v51, 4294901760
    %v1330 = vsub.f32 %v51, %v1329
    %1331 = vmatprep.subr.mxu0 %v1330
    %v1332 = vand.u32 %v50, 4294901760
    %v1333 = vsub.f32 %v50, %v1332
    %1334 = vmatpush1.msra.mxu0 %v1333
    %v1335 = vand.u32 %v55, 4294901760
    %v1336 = vsub.f32 %v55, %v1335
    %1337 = vmatprep.subr.mxu0 %v1336
    %v1338 = vand.u32 %v54, 4294901760
    %v1339 = vsub.f32 %v54, %v1338
    %1340 = vmatpush1.msra.mxu0 %v1339
    %v1341 = vand.u32 %v59, 4294901760
    %v1342 = vsub.f32 %v59, %v1341
    %1343 = vmatprep.subr.mxu0 %v1342
    %v1344 = vand.u32 %v58, 4294901760
    %v1345 = vsub.f32 %v58, %v1344
    %1346 = vmatpush1.msra.mxu0 %v1345
    %v1347 = vand.u32 %v63, 4294901760
    %v1348 = vsub.f32 %v63, %v1347
    %1349 = vmatprep.subr.mxu0 %v1348
    %v1350 = vand.u32 %v62, 4294901760
    %v1351 = vsub.f32 %v62, %v1350
    %1352 = vmatpush1.msra.mxu0 %v1351
    %v1353 = vand.u32 %v67, 4294901760
    %v1354 = vsub.f32 %v67, %v1353
    %1355 = vmatprep.subr.mxu0 %v1354
    %v1356 = vand.u32 %v66, 4294901760
    %v1357 = vsub.f32 %v66, %v1356
    %1358 = vmatpush1.msra.mxu0 %v1357
    %v1359 = vand.u32 %v71, 4294901760
    %v1360 = vsub.f32 %v71, %v1359
    %1361 = vmatprep.subr.mxu0 %v1360
    %v1362 = vand.u32 %v70, 4294901760
    %v1363 = vsub.f32 %v70, %v1362
    %1364 = vmatpush1.msra.mxu0 %v1363
    %v1365 = vand.u32 %v75, 4294901760
    %v1366 = vsub.f32 %v75, %v1365
    %1367 = vmatprep.subr.mxu0 %v1366
    %v1368 = vand.u32 %v74, 4294901760
    %v1369 = vsub.f32 %v74, %v1368
    %1370 = vmatpush1.msra.mxu0 %v1369
    %v1371 = vand.u32 %v79, 4294901760
    %v1372 = vsub.f32 %v79, %v1371
    %1373 = vmatprep.subr.mxu0 %v1372
    %v1374 = vand.u32 %v78, 4294901760
    %v1375 = vsub.f32 %v78, %v1374
    %1376 = vmatpush1.msra.mxu0 %v1375
    %v1377 = vand.u32 %v83, 4294901760
    %v1378 = vsub.f32 %v83, %v1377
    %1379 = vmatprep.subr.mxu0 %v1378
    %v1380 = vand.u32 %v82, 4294901760
    %v1381 = vsub.f32 %v82, %v1380
    %1382 = vmatpush1.msra.mxu0 %v1381
    %v1383 = vand.u32 %v87, 4294901760
    %v1384 = vsub.f32 %v87, %v1383
    %1385 = vmatprep.subr.mxu0 %v1384
    %v1386 = vand.u32 %v86, 4294901760
    %v1387 = vsub.f32 %v86, %v1386
    %1388 = vmatpush1.msra.mxu0 %v1387
    %v1389 = vand.u32 %v91, 4294901760
    %v1390 = vsub.f32 %v91, %v1389
    %1391 = vmatprep.subr.mxu0 %v1390
    %v1392 = vand.u32 %v90, 4294901760
    %v1393 = vsub.f32 %v90, %v1392
    %1394 = vmatpush1.msra.mxu0 %v1393
    %v1395 = vand.u32 %v95, 4294901760
    %v1396 = vsub.f32 %v95, %v1395
    %1397 = vmatprep.subr.mxu0 %v1396
    %v1398 = vand.u32 %v94, 4294901760
    %v1399 = vsub.f32 %v94, %v1398
    %1400 = vmatpush1.msra.mxu0 %v1399
    %v1401 = vand.u32 %v99, 4294901760
    %v1402 = vsub.f32 %v99, %v1401
    %1403 = vmatprep.subr.mxu0 %v1402
    %v1404 = vand.u32 %v98, 4294901760
    %v1405 = vsub.f32 %v98, %v1404
    %1406 = vmatpush1.msra.mxu0 %v1405
    %v1407 = vand.u32 %v103, 4294901760
    %v1408 = vsub.f32 %v103, %v1407
    %1409 = vmatprep.subr.mxu0 %v1408
    %v1410 = vand.u32 %v102, 4294901760
    %v1411 = vsub.f32 %v102, %v1410
    %1412 = vmatpush1.msra.mxu0 %v1411
    %v1413 = vand.u32 %v107, 4294901760
    %v1414 = vsub.f32 %v107, %v1413
    %1415 = vmatprep.subr.mxu0 %v1414
    %v1416 = vand.u32 %v106, 4294901760
    %v1417 = vsub.f32 %v106, %v1416
    %1418 = vmatpush1.msra.mxu0 %v1417
    %v1419 = vand.u32 %v111, 4294901760
    %v1420 = vsub.f32 %v111, %v1419
    %1421 = vmatprep.subr.mxu0 %v1420
    %v1422 = vand.u32 %v110, 4294901760
    %v1423 = vsub.f32 %v110, %v1422
    %1424 = vmatpush1.msra.mxu0 %v1423
    %1425 = vmatprep.subr.mxu0 0.0
    %1426 = vmatpush1.msra.mxu0 0.0
    %1427 = vmatprep.subr.mxu0 0.0
    %1428 = vmatpush1.msra.mxu0 0.0
    %1429 = vmatprep.subr.mxu0 0.0
    %1430 = vmatpush1.msra.mxu0 0.0
    %1431 = vmatprep.subr.mxu0 0.0
    %1432 = vmatpush1.msra.mxu0 0.0
    %1433 = vmatprep.subr.mxu0 0.0
    %1434 = vmatpush1.msra.mxu0 0.0
    %1435 = vmatprep.subr.mxu0 0.0
    %1436 = vmatpush1.msra.mxu0 0.0
    %1437 = vmatprep.subr.mxu0 0.0
    %1438 = vmatpush1.msra.mxu0 0.0
    %1439 = vmatprep.subr.mxu0 0.0
    %1440 = vmatpush1.msra.mxu0 0.0
    %1441 = vmatprep.subr.mxu0 0.0
    %1442 = vmatpush1.msra.mxu0 0.0
    %1443 = vmatprep.subr.mxu0 0.0
    %1444 = vmatpush1.msra.mxu0 0.0
    %1445 = vmatprep.subr.mxu0 0.0
    %1446 = vmatpush1.msra.mxu0 0.0
    %1447 = vmatprep.subr.mxu0 0.0
    %1448 = vmatpush1.msra.mxu0 0.0
    %1449 = vmatprep.subr.mxu0 0.0
    %1450 = vmatpush1.msra.mxu0 0.0
    %1451 = vmatprep.subr.mxu0 0.0
    %1452 = vmatpush1.msra.mxu0 0.0
    %1453 = vmatprep.subr.mxu0 0.0
    %1454 = vmatpush1.msra.mxu0 0.0
    %1455 = vmatprep.subr.mxu0 0.0
    %1456 = vmatpush1.msra.mxu0 0.0
    %1457 = vmatprep.mubr.f32.mxu0 0.0
    %v1458 = vand.u32 %v47, 4294901760
    %v1459 = vsub.f32 %v47, %v1458
    %1460 = vmatmul.mubr.f32.gmra.mrb[0].mxu0 %v1459
    %v1461 = vpop.f32.mrb[0].mxu0
    %v1462 = vadd.f32 %v1325, %v1461
    %v1463 = vpop.f32.mrb[0].mxu0
    %v1464 = vadd.f32 %v1327, %v1463
    %1465 = vdwg.mxu0
    %v1466 = vand.u32 %v51, 4294901760
    %1467 = vmatprep.subr.mxu0 %v1466
    %v1468 = vand.u32 %v50, 4294901760
    %1469 = vmatpush1.msra.mxu0 %v1468
    %v1470 = vand.u32 %v55, 4294901760
    %1471 = vmatprep.subr.mxu0 %v1470
    %v1472 = vand.u32 %v54, 4294901760
    %1473 = vmatpush1.msra.mxu0 %v1472
    %v1474 = vand.u32 %v59, 4294901760
    %1475 = vmatprep.subr.mxu0 %v1474
    %v1476 = vand.u32 %v58, 4294901760
    %1477 = vmatpush1.msra.mxu0 %v1476
    %v1478 = vand.u32 %v63, 4294901760
    %1479 = vmatprep.subr.mxu0 %v1478
    %v1480 = vand.u32 %v62, 4294901760
    %1481 = vmatpush1.msra.mxu0 %v1480
    %v1482 = vand.u32 %v67, 4294901760
    %1483 = vmatprep.subr.mxu0 %v1482
    %v1484 = vand.u32 %v66, 4294901760
    %1485 = vmatpush1.msra.mxu0 %v1484
    %v1486 = vand.u32 %v71, 4294901760
    %1487 = vmatprep.subr.mxu0 %v1486
    %v1488 = vand.u32 %v70, 4294901760
    %1489 = vmatpush1.msra.mxu0 %v1488
    %v1490 = vand.u32 %v75, 4294901760
    %1491 = vmatprep.subr.mxu0 %v1490
    %v1492 = vand.u32 %v74, 4294901760
    %1493 = vmatpush1.msra.mxu0 %v1492
    %v1494 = vand.u32 %v79, 4294901760
    %1495 = vmatprep.subr.mxu0 %v1494
    %v1496 = vand.u32 %v78, 4294901760
    %1497 = vmatpush1.msra.mxu0 %v1496
    %v1498 = vand.u32 %v83, 4294901760
    %1499 = vmatprep.subr.mxu0 %v1498
    %v1500 = vand.u32 %v82, 4294901760
    %1501 = vmatpush1.msra.mxu0 %v1500
    %v1502 = vand.u32 %v87, 4294901760
    %1503 = vmatprep.subr.mxu0 %v1502
    %v1504 = vand.u32 %v86, 4294901760
    %1505 = vmatpush1.msra.mxu0 %v1504
    %v1506 = vand.u32 %v91, 4294901760
    %1507 = vmatprep.subr.mxu0 %v1506
    %v1508 = vand.u32 %v90, 4294901760
    %1509 = vmatpush1.msra.mxu0 %v1508
    %v1510 = vand.u32 %v95, 4294901760
    %1511 = vmatprep.subr.mxu0 %v1510
    %v1512 = vand.u32 %v94, 4294901760
    %1513 = vmatpush1.msra.mxu0 %v1512
    %v1514 = vand.u32 %v99, 4294901760
    %1515 = vmatprep.subr.mxu0 %v1514
    %v1516 = vand.u32 %v98, 4294901760
    %1517 = vmatpush1.msra.mxu0 %v1516
    %v1518 = vand.u32 %v103, 4294901760
    %1519 = vmatprep.subr.mxu0 %v1518
    %v1520 = vand.u32 %v102, 4294901760
    %1521 = vmatpush1.msra.mxu0 %v1520
    %v1522 = vand.u32 %v107, 4294901760
    %1523 = vmatprep.subr.mxu0 %v1522
    %v1524 = vand.u32 %v106, 4294901760
    %1525 = vmatpush1.msra.mxu0 %v1524
    %v1526 = vand.u32 %v111, 4294901760
    %1527 = vmatprep.subr.mxu0 %v1526
    %v1528 = vand.u32 %v110, 4294901760
    %1529 = vmatpush1.msra.mxu0 %v1528
    %1530 = vmatprep.subr.mxu0 0.0
    %1531 = vmatpush1.msra.mxu0 0.0
    %1532 = vmatprep.subr.mxu0 0.0
    %1533 = vmatpush1.msra.mxu0 0.0
    %1534 = vmatprep.subr.mxu0 0.0
    %1535 = vmatpush1.msra.mxu0 0.0
    %1536 = vmatprep.subr.mxu0 0.0
    %1537 = vmatpush1.msra.mxu0 0.0
    %1538 = vmatprep.subr.mxu0 0.0
    %1539 = vmatpush1.msra.mxu0 0.0
    %1540 = vmatprep.subr.mxu0 0.0
    %1541 = vmatpush1.msra.mxu0 0.0
    %1542 = vmatprep.subr.mxu0 0.0
    %1543 = vmatpush1.msra.mxu0 0.0
    %1544 = vmatprep.subr.mxu0 0.0
    %1545 = vmatpush1.msra.mxu0 0.0
    %1546 = vmatprep.subr.mxu0 0.0
    %1547 = vmatpush1.msra.mxu0 0.0
    %1548 = vmatprep.subr.mxu0 0.0
    %1549 = vmatpush1.msra.mxu0 0.0
    %1550 = vmatprep.subr.mxu0 0.0
    %1551 = vmatpush1.msra.mxu0 0.0
    %1552 = vmatprep.subr.mxu0 0.0
    %1553 = vmatpush1.msra.mxu0 0.0
    %1554 = vmatprep.subr.mxu0 0.0
    %1555 = vmatpush1.msra.mxu0 0.0
    %1556 = vmatprep.subr.mxu0 0.0
    %1557 = vmatpush1.msra.mxu0 0.0
    %1558 = vmatprep.subr.mxu0 0.0
    %1559 = vmatpush1.msra.mxu0 0.0
    %1560 = vmatprep.subr.mxu0 0.0
    %1561 = vmatpush1.msra.mxu0 0.0
    %1562 = vmatprep.mubr.f32.mxu0 0.0
    %v1563 = vand.u32 %v47, 4294901760
    %v1564 = vsub.f32 %v47, %v1563
    %v1565 = vand.u32 %v1564, 4294901760
    %1566 = vmatmul.mubr.f32.gmra.mrb[0].mxu0 %v1565
    %v1567 = vpop.f32.mrb[0].mxu0
    %v1568 = vadd.f32 %v1462, %v1567
    %v1569 = vpop.f32.mrb[0].mxu0
    %v1570 = vadd.f32 %v1464, %v1569
    %1571 = vdwg.mxu0
    %v1572 = vand.u32 %v51, 4294901760
    %v1573 = vsub.f32 %v51, %v1572
    %v1574 = vand.u32 %v1573, 4294901760
    %1575 = vmatprep.subr.mxu0 %v1574
    %v1576 = vand.u32 %v50, 4294901760
    %v1577 = vsub.f32 %v50, %v1576
    %v1578 = vand.u32 %v1577, 4294901760
    %1579 = vmatpush1.msra.mxu0 %v1578
    %v1580 = vand.u32 %v55, 4294901760
    %v1581 = vsub.f32 %v55, %v1580
    %v1582 = vand.u32 %v1581, 4294901760
    %1583 = vmatprep.subr.mxu0 %v1582
    %v1584 = vand.u32 %v54, 4294901760
    %v1585 = vsub.f32 %v54, %v1584
    %v1586 = vand.u32 %v1585, 4294901760
    %1587 = vmatpush1.msra.mxu0 %v1586
    %v1588 = vand.u32 %v59, 4294901760
    %v1589 = vsub.f32 %v59, %v1588
    %v1590 = vand.u32 %v1589, 4294901760
    %1591 = vmatprep.subr.mxu0 %v1590
    %v1592 = vand.u32 %v58, 4294901760
    %v1593 = vsub.f32 %v58, %v1592
    %v1594 = vand.u32 %v1593, 4294901760
    %1595 = vmatpush1.msra.mxu0 %v1594
    %v1596 = vand.u32 %v63, 4294901760
    %v1597 = vsub.f32 %v63, %v1596
    %v1598 = vand.u32 %v1597, 4294901760
    %1599 = vmatprep.subr.mxu0 %v1598
    %v1600 = vand.u32 %v62, 4294901760
    %v1601 = vsub.f32 %v62, %v1600
    %v1602 = vand.u32 %v1601, 4294901760
    %1603 = vmatpush1.msra.mxu0 %v1602
    %v1604 = vand.u32 %v67, 4294901760
    %v1605 = vsub.f32 %v67, %v1604
    %v1606 = vand.u32 %v1605, 4294901760
    %1607 = vmatprep.subr.mxu0 %v1606
    %v1608 = vand.u32 %v66, 4294901760
    %v1609 = vsub.f32 %v66, %v1608
    %v1610 = vand.u32 %v1609, 4294901760
    %1611 = vmatpush1.msra.mxu0 %v1610
    %v1612 = vand.u32 %v71, 4294901760
    %v1613 = vsub.f32 %v71, %v1612
    %v1614 = vand.u32 %v1613, 4294901760
    %1615 = vmatprep.subr.mxu0 %v1614
    %v1616 = vand.u32 %v70, 4294901760
    %v1617 = vsub.f32 %v70, %v1616
    %v1618 = vand.u32 %v1617, 4294901760
    %1619 = vmatpush1.msra.mxu0 %v1618
    %v1620 = vand.u32 %v75, 4294901760
    %v1621 = vsub.f32 %v75, %v1620
    %v1622 = vand.u32 %v1621, 4294901760
    %1623 = vmatprep.subr.mxu0 %v1622
    %v1624 = vand.u32 %v74, 4294901760
    %v1625 = vsub.f32 %v74, %v1624
    %v1626 = vand.u32 %v1625, 4294901760
    %1627 = vmatpush1.msra.mxu0 %v1626
    %v1628 = vand.u32 %v79, 4294901760
    %v1629 = vsub.f32 %v79, %v1628
    %v1630 = vand.u32 %v1629, 4294901760
    %1631 = vmatprep.subr.mxu0 %v1630
    %v1632 = vand.u32 %v78, 4294901760
    %v1633 = vsub.f32 %v78, %v1632
    %v1634 = vand.u32 %v1633, 4294901760
    %1635 = vmatpush1.msra.mxu0 %v1634
    %v1636 = vand.u32 %v83, 4294901760
    %v1637 = vsub.f32 %v83, %v1636
    %v1638 = vand.u32 %v1637, 4294901760
    %1639 = vmatprep.subr.mxu0 %v1638
    %v1640 = vand.u32 %v82, 4294901760
    %v1641 = vsub.f32 %v82, %v1640
    %v1642 = vand.u32 %v1641, 4294901760
    %1643 = vmatpush1.msra.mxu0 %v1642
    %v1644 = vand.u32 %v87, 4294901760
    %v1645 = vsub.f32 %v87, %v1644
    %v1646 = vand.u32 %v1645, 4294901760
    %1647 = vmatprep.subr.mxu0 %v1646
    %v1648 = vand.u32 %v86, 4294901760
    %v1649 = vsub.f32 %v86, %v1648
    %v1650 = vand.u32 %v1649, 4294901760
    %1651 = vmatpush1.msra.mxu0 %v1650
    %v1652 = vand.u32 %v91, 4294901760
    %v1653 = vsub.f32 %v91, %v1652
    %v1654 = vand.u32 %v1653, 4294901760
    %1655 = vmatprep.subr.mxu0 %v1654
    %v1656 = vand.u32 %v90, 4294901760
    %v1657 = vsub.f32 %v90, %v1656
    %v1658 = vand.u32 %v1657, 4294901760
    %1659 = vmatpush1.msra.mxu0 %v1658
    %v1660 = vand.u32 %v95, 4294901760
    %v1661 = vsub.f32 %v95, %v1660
    %v1662 = vand.u32 %v1661, 4294901760
    %1663 = vmatprep.subr.mxu0 %v1662
    %v1664 = vand.u32 %v94, 4294901760
    %v1665 = vsub.f32 %v94, %v1664
    %v1666 = vand.u32 %v1665, 4294901760
    %1667 = vmatpush1.msra.mxu0 %v1666
    %v1668 = vand.u32 %v99, 4294901760
    %v1669 = vsub.f32 %v99, %v1668
    %v1670 = vand.u32 %v1669, 4294901760
    %1671 = vmatprep.subr.mxu0 %v1670
    %v1672 = vand.u32 %v98, 4294901760
    %v1673 = vsub.f32 %v98, %v1672
    %v1674 = vand.u32 %v1673, 4294901760
    %1675 = vmatpush1.msra.mxu0 %v1674
    %v1676 = vand.u32 %v103, 4294901760
    %v1677 = vsub.f32 %v103, %v1676
    %v1678 = vand.u32 %v1677, 4294901760
    %1679 = vmatprep.subr.mxu0 %v1678
    %v1680 = vand.u32 %v102, 4294901760
    %v1681 = vsub.f32 %v102, %v1680
    %v1682 = vand.u32 %v1681, 4294901760
    %1683 = vmatpush1.msra.mxu0 %v1682
    %v1684 = vand.u32 %v107, 4294901760
    %v1685 = vsub.f32 %v107, %v1684
    %v1686 = vand.u32 %v1685, 4294901760
    %1687 = vmatprep.subr.mxu0 %v1686
    %v1688 = vand.u32 %v106, 4294901760
    %v1689 = vsub.f32 %v106, %v1688
    %v1690 = vand.u32 %v1689, 4294901760
    %1691 = vmatpush1.msra.mxu0 %v1690
    %v1692 = vand.u32 %v111, 4294901760
    %v1693 = vsub.f32 %v111, %v1692
    %v1694 = vand.u32 %v1693, 4294901760
    %1695 = vmatprep.subr.mxu0 %v1694
    %v1696 = vand.u32 %v110, 4294901760
    %v1697 = vsub.f32 %v110, %v1696
    %v1698 = vand.u32 %v1697, 4294901760
    %1699 = vmatpush1.msra.mxu0 %v1698
    %1700 = vmatprep.subr.mxu0 0.0
    %1701 = vmatpush1.msra.mxu0 0.0
    %1702 = vmatprep.subr.mxu0 0.0
    %1703 = vmatpush1.msra.mxu0 0.0
    %1704 = vmatprep.subr.mxu0 0.0
    %1705 = vmatpush1.msra.mxu0 0.0
    %1706 = vmatprep.subr.mxu0 0.0
    %1707 = vmatpush1.msra.mxu0 0.0
    %1708 = vmatprep.subr.mxu0 0.0
    %1709 = vmatpush1.msra.mxu0 0.0
    %1710 = vmatprep.subr.mxu0 0.0
    %1711 = vmatpush1.msra.mxu0 0.0
    %1712 = vmatprep.subr.mxu0 0.0
    %1713 = vmatpush1.msra.mxu0 0.0
    %1714 = vmatprep.subr.mxu0 0.0
    %1715 = vmatpush1.msra.mxu0 0.0
    %1716 = vmatprep.subr.mxu0 0.0
    %1717 = vmatpush1.msra.mxu0 0.0
    %1718 = vmatprep.subr.mxu0 0.0
    %1719 = vmatpush1.msra.mxu0 0.0
    %1720 = vmatprep.subr.mxu0 0.0
    %1721 = vmatpush1.msra.mxu0 0.0
    %1722 = vmatprep.subr.mxu0 0.0
    %1723 = vmatpush1.msra.mxu0 0.0
    %1724 = vmatprep.subr.mxu0 0.0
    %1725 = vmatpush1.msra.mxu0 0.0
    %1726 = vmatprep.subr.mxu0 0.0
    %1727 = vmatpush1.msra.mxu0 0.0
    %1728 = vmatprep.subr.mxu0 0.0
    %1729 = vmatpush1.msra.mxu0 0.0
    %1730 = vmatprep.subr.mxu0 0.0
    %1731 = vmatpush1.msra.mxu0 0.0
    %1732 = vmatprep.mubr.f32.mxu0 0.0
    %v1733 = vand.u32 %v47, 4294901760
    %1734 = vmatmul.mubr.f32.gmra.mrb[0].mxu0 %v1733
    %v1735 = vpop.f32.mrb[0].mxu0
    %v1736 = vadd.f32 %v1568, %v1735
    %v1737 = vpop.f32.mrb[0].mxu0
    %v1738 = vadd.f32 %v1570, %v1737
    %1739 = vdwg.mxu0
    %v1740 = vand.u32 %v51, 4294901760
    %1741 = vmatprep.subr.mxu0 %v1740
    %v1742 = vand.u32 %v50, 4294901760
    %1743 = vmatpush1.msra.mxu0 %v1742
    %v1744 = vand.u32 %v55, 4294901760
    %1745 = vmatprep.subr.mxu0 %v1744
    %v1746 = vand.u32 %v54, 4294901760
    %1747 = vmatpush1.msra.mxu0 %v1746
    %v1748 = vand.u32 %v59, 4294901760
    %1749 = vmatprep.subr.mxu0 %v1748
    %v1750 = vand.u32 %v58, 4294901760
    %1751 = vmatpush1.msra.mxu0 %v1750
    %v1752 = vand.u32 %v63, 4294901760
    %1753 = vmatprep.subr.mxu0 %v1752
    %v1754 = vand.u32 %v62, 4294901760
    %1755 = vmatpush1.msra.mxu0 %v1754
    %v1756 = vand.u32 %v67, 4294901760
    %1757 = vmatprep.subr.mxu0 %v1756
    %v1758 = vand.u32 %v66, 4294901760
    %1759 = vmatpush1.msra.mxu0 %v1758
    %v1760 = vand.u32 %v71, 4294901760
    %1761 = vmatprep.subr.mxu0 %v1760
    %v1762 = vand.u32 %v70, 4294901760
    %1763 = vmatpush1.msra.mxu0 %v1762
    %v1764 = vand.u32 %v75, 4294901760
    %1765 = vmatprep.subr.mxu0 %v1764
    %v1766 = vand.u32 %v74, 4294901760
    %1767 = vmatpush1.msra.mxu0 %v1766
    %v1768 = vand.u32 %v79, 4294901760
    %1769 = vmatprep.subr.mxu0 %v1768
    %v1770 = vand.u32 %v78, 4294901760
    %1771 = vmatpush1.msra.mxu0 %v1770
    %v1772 = vand.u32 %v83, 4294901760
    %1773 = vmatprep.subr.mxu0 %v1772
    %v1774 = vand.u32 %v82, 4294901760
    %1775 = vmatpush1.msra.mxu0 %v1774
    %v1776 = vand.u32 %v87, 4294901760
    %1777 = vmatprep.subr.mxu0 %v1776
    %v1778 = vand.u32 %v86, 4294901760
    %1779 = vmatpush1.msra.mxu0 %v1778
    %v1780 = vand.u32 %v91, 4294901760
    %1781 = vmatprep.subr.mxu0 %v1780
    %v1782 = vand.u32 %v90, 4294901760
    %1783 = vmatpush1.msra.mxu0 %v1782
    %v1784 = vand.u32 %v95, 4294901760
    %1785 = vmatprep.subr.mxu0 %v1784
    %v1786 = vand.u32 %v94, 4294901760
    %1787 = vmatpush1.msra.mxu0 %v1786
    %v1788 = vand.u32 %v99, 4294901760
    %1789 = vmatprep.subr.mxu0 %v1788
    %v1790 = vand.u32 %v98, 4294901760
    %1791 = vmatpush1.msra.mxu0 %v1790
    %v1792 = vand.u32 %v103, 4294901760
    %1793 = vmatprep.subr.mxu0 %v1792
    %v1794 = vand.u32 %v102, 4294901760
    %1795 = vmatpush1.msra.mxu0 %v1794
    %v1796 = vand.u32 %v107, 4294901760
    %1797 = vmatprep.subr.mxu0 %v1796
    %v1798 = vand.u32 %v106, 4294901760
    %1799 = vmatpush1.msra.mxu0 %v1798
    %v1800 = vand.u32 %v111, 4294901760
    %1801 = vmatprep.subr.mxu0 %v1800
    %v1802 = vand.u32 %v110, 4294901760
    %1803 = vmatpush1.msra.mxu0 %v1802
    %1804 = vmatprep.subr.mxu0 0.0
    %1805 = vmatpush1.msra.mxu0 0.0
    %1806 = vmatprep.subr.mxu0 0.0
    %1807 = vmatpush1.msra.mxu0 0.0
    %1808 = vmatprep.subr.mxu0 0.0
    %1809 = vmatpush1.msra.mxu0 0.0
    %1810 = vmatprep.subr.mxu0 0.0
    %1811 = vmatpush1.msra.mxu0 0.0
    %1812 = vmatprep.subr.mxu0 0.0
    %1813 = vmatpush1.msra.mxu0 0.0
    %1814 = vmatprep.subr.mxu0 0.0
    %1815 = vmatpush1.msra.mxu0 0.0
    %1816 = vmatprep.subr.mxu0 0.0
    %1817 = vmatpush1.msra.mxu0 0.0
    %1818 = vmatprep.subr.mxu0 0.0
    %1819 = vmatpush1.msra.mxu0 0.0
    %1820 = vmatprep.subr.mxu0 0.0
    %1821 = vmatpush1.msra.mxu0 0.0
    %1822 = vmatprep.subr.mxu0 0.0
    %1823 = vmatpush1.msra.mxu0 0.0
    %1824 = vmatprep.subr.mxu0 0.0
    %1825 = vmatpush1.msra.mxu0 0.0
    %1826 = vmatprep.subr.mxu0 0.0
    %1827 = vmatpush1.msra.mxu0 0.0
    %1828 = vmatprep.subr.mxu0 0.0
    %1829 = vmatpush1.msra.mxu0 0.0
    %1830 = vmatprep.subr.mxu0 0.0
    %1831 = vmatpush1.msra.mxu0 0.0
    %1832 = vmatprep.subr.mxu0 0.0
    %1833 = vmatpush1.msra.mxu0 0.0
    %1834 = vmatprep.subr.mxu0 0.0
    %1835 = vmatpush1.msra.mxu0 0.0
    %1836 = vmatprep.mubr.f32.mxu0 0.0
    %v1837 = vand.u32 %v47, 4294901760
    %1838 = vmatmul.mubr.f32.gmra.mrb[0].mxu0 %v1837
    %v1839 = vpop.f32.mrb[0].mxu0
    %v1840 = vadd.f32 %v1736, %v1839
    %v1841 = vpop.f32.mrb[0].mxu0
    %v1842 = vadd.f32 %v1738, %v1841
    %1843 = vdwg.mxu0
    %v1848 = vcombine.low %v985, %v987
    %v1849 = vcombine.low %v1840, %v1842
    %1852 = vst [vmem:[#allocation7] sm:$0xff] %v1848
    %1853 = vst [vmem:[#allocation7 + $0x8] sm:$0xff] %v1849
    // Predicated region
    $region22: #{tpu_custom_call.1} parent=1 // pred_check
      _
    $region23: #{tpu_custom_call.1} parent=1 // pred_check_branch
      %1855 = sbr.rel (0) target = $region25
    $region24: #{tpu_custom_call.1} parent=1 // pred_region
      %s1857 = ssub.s32 256, 256
      %1858 = vsyncadd [#allocation4], %s1857
      %s1860 = sshll.u32 [#allocation7], 4
      %s1861 = int_to_ptr.vmem [resolvable:$true] %s1860
      %1863 = dma.vmem_to_hbm [thread:$0]  %s1861, 256, %s3, [#allocation4]
    $region25: #{tpu_custom_call.1} parent=1 // pred_fallthru
      _
    // Predicated region
    $region26: #{tpu_custom_call.1} parent=1 // pred_check
      _
    $region27: #{tpu_custom_call.1} parent=1 // pred_check_branch
      %1865 = sbr.rel (0) target = $region29
    $region28: #{tpu_custom_call.1} parent=1 // pred_region
      %1866 = dma.done [#allocation4], 256
    $region29: #{tpu_custom_call.1} parent=1 // pred_fallthru
      _
    %1867 = vsyncpa [#allocation3], 1
    %1868 = vsyncpa [#allocation6], 1
    %1869 = vsyncpa [#allocation4], 1

</llo_original>
